<compile_context>
chip_gen: v6e
topology: v6e:2x2x1
jax: 0.10.0
libtpu: 0.0.40
codegen_flags: <defaults>
</compile_context>

<pallas_src>
import jax
import jax.numpy as jnp
from jax.experimental import pallas as pl
from jax.experimental.pallas import tpu as pltpu

# (in_features, out_features) per applied layer, in_features chained.
_LAYER_DIMS = [(64, 128), (128, 16), (16, 32), (32, 16), (16, 128), (128, 16), (16, 16)]
N_LAYERS = len(_LAYER_DIMS)
D_PAD = 128                 # every layer padded to 128x128
N_IN = _LAYER_DIMS[0][0]    # 64
N_OUT = _LAYER_DIMS[-1][1]  # 16
TILE_B = 128

_C1 = 0.7978845608028654
_C2 = 0.044715 * _C1


def _fused_mlp_kernel(x_ref, w_ref, b_ref, o_ref):
    """x_ref: (TILE_B, 128) f32, w_ref: (7, 128, 128) bf16, b_ref: (8, 128) f32,
    o_ref: (TILE_B, 128) f32.  All intermediates live in vregs."""
    h = x_ref[...].astype(jnp.float32)          # (TILE_B, 128)
    b_all = b_ref[...]                          # one vreg, hoisted once
    for layer in range(N_LAYERS):
        w = w_ref[layer]                        # (128, 128) bf16, static index
        b = b_all[layer:layer + 1, :]           # (1, 128) f32
        v = jnp.dot(h.astype(w.dtype), w,
                    preferred_element_type=jnp.float32) + b
        # tanh-GELU with folded constants:
        #   h = v * (0.5*tanh(v*(C1 + C2*v^2)) + 0.5)
        inner = v * (_C1 + _C2 * (v * v))
        h = v * (0.5 * jnp.tanh(inner) + 0.5)
    o_ref[...] = h.astype(o_ref.dtype)


def fused_mlp(x, w_packed, b_packed):
    """x: (B, 64) f32; returns (B, 16) f32."""
    B = x.shape[0]
    n_tiles = max(1, (B + TILE_B - 1) // TILE_B)
    Bp = n_tiles * TILE_B
    # Pad rows to a multiple of TILE_B and lanes to 128 (zeros).
    xp = jnp.zeros((Bp, D_PAD), x.dtype).at[:B, :N_IN].set(x)

    flops = 2 * Bp * N_LAYERS * D_PAD * D_PAD
    transcendentals = Bp * N_LAYERS * D_PAD
    bytes_accessed = (Bp * D_PAD * 4 * 2                 # x in + out
                      + N_LAYERS * D_PAD * D_PAD * 2     # bf16 weights
                      + 8 * D_PAD * 4)                   # biases

    out = pl.pallas_call(
        _fused_mlp_kernel,
        out_shape=jax.ShapeDtypeStruct((Bp, D_PAD), jnp.float32),
        grid=(n_tiles,),
        in_specs=[
            pl.BlockSpec((TILE_B, D_PAD), lambda i: (i, 0)),
            pl.BlockSpec((N_LAYERS, D_PAD, D_PAD), lambda i: (0, 0, 0)),  # resident
            pl.BlockSpec((8, D_PAD), lambda i: (0, 0)),                   # resident
        ],
        out_specs=pl.BlockSpec((TILE_B, D_PAD), lambda i: (i, 0)),
        compiler_params=pltpu.CompilerParams(
            dimension_semantics=("parallel",)),
        cost_estimate=pl.CostEstimate(
            flops=flops, transcendentals=transcendentals,
            bytes_accessed=bytes_accessed),
    )(xp, w_packed, b_packed)
    return out[:B, :N_OUT]


def init_params(seed=0):
    """PyTorch-default U(-1/sqrt(fan_in)) init, packed & padded once at init."""
    key = jax.random.PRNGKey(seed)
    keys = jax.random.split(key, N_LAYERS)
    w_packed = jnp.zeros((N_LAYERS, D_PAD, D_PAD), jnp.bfloat16)
    b_packed = jnp.zeros((8, D_PAD), jnp.float32)
    for l, (k, (in_f, out_f)) in enumerate(zip(keys, _LAYER_DIMS)):
        kw, kb = jax.random.split(k)
        bound = 1.0 / (in_f ** 0.5)
        w = jax.random.uniform(kw, (out_f, in_f), jnp.float32, -bound, bound)
        b = jax.random.uniform(kb, (out_f,), jnp.float32, -bound, bound)
        # Stored as (in, out) so the kernel does lane-dense h @ W; zero padding
        # beyond (in_f, out_f) keeps padded lanes exactly zero through the chain.
        w_packed = w_packed.at[l, :in_f, :out_f].set(w.T.astype(jnp.bfloat16))
        b_packed = b_packed.at[l, :out_f].set(b)
    return w_packed, b_packed


@jax.jit
def model_forward(x, w_packed, b_packed):
    return fused_mlp(x, w_packed, b_packed)


if __name__ == "__main__":
    key = jax.random.PRNGKey(0)
    k_spec, k_batch = jax.random.split(key)
    w_packed, b_packed = init_params(seed=0)

    # Spec-shaped input (matches the module's x7 = torch.randn(1, 64)).
    x_spec = jax.random.normal(k_spec, (1, 64), dtype=jnp.float32)
    out_spec = model_forward(x_spec, w_packed, b_packed)
    jax.block_until_ready(out_spec)
    assert out_spec.shape == (1, N_OUT), out_spec.shape
    assert bool(jnp.all(jnp.isfinite(out_spec)))

    # Batched input (amortizes launch/DMA cost, exercises the parallel grid).
    x_batch = jax.random.normal(k_batch, (256, 64), dtype=jnp.float32)
    out_batch = model_forward(x_batch, w_packed, b_packed)
    jax.block_until_ready(out_batch)
    assert out_batch.shape == (256, N_OUT), out_batch.shape
    assert bool(jnp.all(jnp.isfinite(out_batch)))

    print("KERNEL_OK")
</pallas_src>

<mosaic_0001>
module attributes {stable_mosaic.version = 11 : i64} {
  func.func @_fused_mlp_kernel(%arg0: i32, %arg1: memref<128x128xf32, #tpu.memory_space<vmem>>, %arg2: memref<7x128x128xbf16, #tpu.memory_space<vmem>>, %arg3: memref<8x128xf32, #tpu.memory_space<vmem>>, %arg4: memref<128x128xf32, #tpu.memory_space<vmem>>) attributes {dimension_semantics = [#tpu.dimension_semantics<parallel>], iteration_bounds = array<i64: 1>, scalar_prefetch = 0 : i64, scratch_operands = 0 : i64, tpu.core_type = #tpu.core_type<tc>, window_params = [{transform_indices = @transform_0, window_bounds = array<i64: 128, 128>}, {pipeline_mode = #tpu.pipeline_mode<synchronous>, transform_indices = @transform_1, window_bounds = array<i64: 7, 128, 128>}, {pipeline_mode = #tpu.pipeline_mode<synchronous>, transform_indices = @transform_2, window_bounds = array<i64: 8, 128>}, {transform_indices = @transform_3, window_bounds = array<i64: 128, 128>}]} {
    %c0 = arith.constant 0 : index
    %c0_0 = arith.constant 0 : index
    %0 = vector.load %arg1[%c0, %c0_0] : memref<128x128xf32, #tpu.memory_space<vmem>>, vector<128x128xf32>
    %c0_1 = arith.constant 0 : index
    %c0_2 = arith.constant 0 : index
    %1 = vector.load %arg3[%c0_1, %c0_2] : memref<8x128xf32, #tpu.memory_space<vmem>>, vector<8x128xf32>
    %c0_3 = arith.constant 0 : index
    %c0_4 = arith.constant 0 : index
    %c0_5 = arith.constant 0 : index
    %2 = vector.load %arg2[%c0_3, %c0_4, %c0_5] : memref<7x128x128xbf16, #tpu.memory_space<vmem>>, vector<1x128x128xbf16>
    %3 = vector.shape_cast %2 : vector<1x128x128xbf16> to vector<128x128xbf16>
    %4 = vector.extract_strided_slice %1 {offsets = [0, 0], sizes = [1, 128], strides = [1, 1]} : vector<8x128xf32> to vector<1x128xf32>
    %5 = arith.truncf %0 : vector<128x128xf32> to vector<128x128xbf16>
    %cst = arith.constant dense<0.000000e+00> : vector<128x128xf32>
    %6 = tpu.matmul %5, %3, %cst {dimension_numbers = #tpu.dot_dimension_numbers<[1], [0], [0], [1], [0, 0, 1, 1], [], []>} : vector<128x128xbf16>, vector<128x128xbf16>, vector<128x128xf32> -> vector<128x128xf32>
    %7 = vector.broadcast %4 : vector<1x128xf32> to vector<128x128xf32>
    %8 = arith.addf %6, %7 : vector<128x128xf32>
    %9 = arith.mulf %8, %8 : vector<128x128xf32>
    %cst_6 = arith.constant 0.0356774069 : f32
    %10 = vector.broadcast %cst_6 : f32 to vector<128x128xf32>
    %11 = arith.mulf %10, %9 : vector<128x128xf32>
    %cst_7 = arith.constant 0.797884583 : f32
    %12 = vector.broadcast %cst_7 : f32 to vector<128x128xf32>
    %13 = arith.addf %12, %11 : vector<128x128xf32>
    %14 = arith.mulf %8, %13 : vector<128x128xf32>
    %15 = math.tanh %14 : vector<128x128xf32>
    %cst_8 = arith.constant 5.000000e-01 : f32
    %16 = vector.broadcast %cst_8 : f32 to vector<128x128xf32>
    %17 = arith.mulf %16, %15 : vector<128x128xf32>
    %cst_9 = arith.constant 5.000000e-01 : f32
    %18 = vector.broadcast %cst_9 : f32 to vector<128x128xf32>
    %19 = arith.addf %17, %18 : vector<128x128xf32>
    %20 = arith.mulf %8, %19 : vector<128x128xf32>
    %c1 = arith.constant 1 : index
    %c0_10 = arith.constant 0 : index
    %c0_11 = arith.constant 0 : index
    %21 = vector.load %arg2[%c1, %c0_10, %c0_11] : memref<7x128x128xbf16, #tpu.memory_space<vmem>>, vector<1x128x128xbf16>
    %22 = vector.shape_cast %21 : vector<1x128x128xbf16> to vector<128x128xbf16>
    %23 = vector.extract_strided_slice %1 {offsets = [1, 0], sizes = [1, 128], strides = [1, 1]} : vector<8x128xf32> to vector<1x128xf32>
    %24 = arith.truncf %20 : vector<128x128xf32> to vector<128x128xbf16>
    %cst_12 = arith.constant dense<0.000000e+00> : vector<128x128xf32>
    %25 = tpu.matmul %24, %22, %cst_12 {dimension_numbers = #tpu.dot_dimension_numbers<[1], [0], [0], [1], [0, 0, 1, 1], [], []>} : vector<128x128xbf16>, vector<128x128xbf16>, vector<128x128xf32> -> vector<128x128xf32>
    %26 = vector.broadcast %23 : vector<1x128xf32> to vector<128x128xf32>
    %27 = arith.addf %25, %26 : vector<128x128xf32>
    %28 = arith.mulf %27, %27 : vector<128x128xf32>
    %cst_13 = arith.constant 0.0356774069 : f32
    %29 = vector.broadcast %cst_13 : f32 to vector<128x128xf32>
    %30 = arith.mulf %29, %28 : vector<128x128xf32>
    %cst_14 = arith.constant 0.797884583 : f32
    %31 = vector.broadcast %cst_14 : f32 to vector<128x128xf32>
    %32 = arith.addf %31, %30 : vector<128x128xf32>
    %33 = arith.mulf %27, %32 : vector<128x128xf32>
    %34 = math.tanh %33 : vector<128x128xf32>
    %cst_15 = arith.constant 5.000000e-01 : f32
    %35 = vector.broadcast %cst_15 : f32 to vector<128x128xf32>
    %36 = arith.mulf %35, %34 : vector<128x128xf32>
    %cst_16 = arith.constant 5.000000e-01 : f32
    %37 = vector.broadcast %cst_16 : f32 to vector<128x128xf32>
    %38 = arith.addf %36, %37 : vector<128x128xf32>
    %39 = arith.mulf %27, %38 : vector<128x128xf32>
    %c2 = arith.constant 2 : index
    %c0_17 = arith.constant 0 : index
    %c0_18 = arith.constant 0 : index
    %40 = vector.load %arg2[%c2, %c0_17, %c0_18] : memref<7x128x128xbf16, #tpu.memory_space<vmem>>, vector<1x128x128xbf16>
    %41 = vector.shape_cast %40 : vector<1x128x128xbf16> to vector<128x128xbf16>
    %42 = vector.extract_strided_slice %1 {offsets = [2, 0], sizes = [1, 128], strides = [1, 1]} : vector<8x128xf32> to vector<1x128xf32>
    %43 = arith.truncf %39 : vector<128x128xf32> to vector<128x128xbf16>
    %cst_19 = arith.constant dense<0.000000e+00> : vector<128x128xf32>
    %44 = tpu.matmul %43, %41, %cst_19 {dimension_numbers = #tpu.dot_dimension_numbers<[1], [0], [0], [1], [0, 0, 1, 1], [], []>} : vector<128x128xbf16>, vector<128x128xbf16>, vector<128x128xf32> -> vector<128x128xf32>
    %45 = vector.broadcast %42 : vector<1x128xf32> to vector<128x128xf32>
    %46 = arith.addf %44, %45 : vector<128x128xf32>
    %47 = arith.mulf %46, %46 : vector<128x128xf32>
    %cst_20 = arith.constant 0.0356774069 : f32
    %48 = vector.broadcast %cst_20 : f32 to vector<128x128xf32>
    %49 = arith.mulf %48, %47 : vector<128x128xf32>
    %cst_21 = arith.constant 0.797884583 : f32
    %50 = vector.broadcast %cst_21 : f32 to vector<128x128xf32>
    %51 = arith.addf %50, %49 : vector<128x128xf32>
    %52 = arith.mulf %46, %51 : vector<128x128xf32>
    %53 = math.tanh %52 : vector<128x128xf32>
    %cst_22 = arith.constant 5.000000e-01 : f32
    %54 = vector.broadcast %cst_22 : f32 to vector<128x128xf32>
    %55 = arith.mulf %54, %53 : vector<128x128xf32>
    %cst_23 = arith.constant 5.000000e-01 : f32
    %56 = vector.broadcast %cst_23 : f32 to vector<128x128xf32>
    %57 = arith.addf %55, %56 : vector<128x128xf32>
    %58 = arith.mulf %46, %57 : vector<128x128xf32>
    %c3 = arith.constant 3 : index
    %c0_24 = arith.constant 0 : index
    %c0_25 = arith.constant 0 : index
    %59 = vector.load %arg2[%c3, %c0_24, %c0_25] : memref<7x128x128xbf16, #tpu.memory_space<vmem>>, vector<1x128x128xbf16>
    %60 = vector.shape_cast %59 : vector<1x128x128xbf16> to vector<128x128xbf16>
    %61 = vector.extract_strided_slice %1 {offsets = [3, 0], sizes = [1, 128], strides = [1, 1]} : vector<8x128xf32> to vector<1x128xf32>
    %62 = arith.truncf %58 : vector<128x128xf32> to vector<128x128xbf16>
    %cst_26 = arith.constant dense<0.000000e+00> : vector<128x128xf32>
    %63 = tpu.matmul %62, %60, %cst_26 {dimension_numbers = #tpu.dot_dimension_numbers<[1], [0], [0], [1], [0, 0, 1, 1], [], []>} : vector<128x128xbf16>, vector<128x128xbf16>, vector<128x128xf32> -> vector<128x128xf32>
    %64 = vector.broadcast %61 : vector<1x128xf32> to vector<128x128xf32>
    %65 = arith.addf %63, %64 : vector<128x128xf32>
    %66 = arith.mulf %65, %65 : vector<128x128xf32>
    %cst_27 = arith.constant 0.0356774069 : f32
    %67 = vector.broadcast %cst_27 : f32 to vector<128x128xf32>
    %68 = arith.mulf %67, %66 : vector<128x128xf32>
    %cst_28 = arith.constant 0.797884583 : f32
    %69 = vector.broadcast %cst_28 : f32 to vector<128x128xf32>
    %70 = arith.addf %69, %68 : vector<128x128xf32>
    %71 = arith.mulf %65, %70 : vector<128x128xf32>
    %72 = math.tanh %71 : vector<128x128xf32>
    %cst_29 = arith.constant 5.000000e-01 : f32
    %73 = vector.broadcast %cst_29 : f32 to vector<128x128xf32>
    %74 = arith.mulf %73, %72 : vector<128x128xf32>
    %cst_30 = arith.constant 5.000000e-01 : f32
    %75 = vector.broadcast %cst_30 : f32 to vector<128x128xf32>
    %76 = arith.addf %74, %75 : vector<128x128xf32>
    %77 = arith.mulf %65, %76 : vector<128x128xf32>
    %c4 = arith.constant 4 : index
    %c0_31 = arith.constant 0 : index
    %c0_32 = arith.constant 0 : index
    %78 = vector.load %arg2[%c4, %c0_31, %c0_32] : memref<7x128x128xbf16, #tpu.memory_space<vmem>>, vector<1x128x128xbf16>
    %79 = vector.shape_cast %78 : vector<1x128x128xbf16> to vector<128x128xbf16>
    %80 = vector.extract_strided_slice %1 {offsets = [4, 0], sizes = [1, 128], strides = [1, 1]} : vector<8x128xf32> to vector<1x128xf32>
    %81 = arith.truncf %77 : vector<128x128xf32> to vector<128x128xbf16>
    %cst_33 = arith.constant dense<0.000000e+00> : vector<128x128xf32>
    %82 = tpu.matmul %81, %79, %cst_33 {dimension_numbers = #tpu.dot_dimension_numbers<[1], [0], [0], [1], [0, 0, 1, 1], [], []>} : vector<128x128xbf16>, vector<128x128xbf16>, vector<128x128xf32> -> vector<128x128xf32>
    %83 = vector.broadcast %80 : vector<1x128xf32> to vector<128x128xf32>
    %84 = arith.addf %82, %83 : vector<128x128xf32>
    %85 = arith.mulf %84, %84 : vector<128x128xf32>
    %cst_34 = arith.constant 0.0356774069 : f32
    %86 = vector.broadcast %cst_34 : f32 to vector<128x128xf32>
    %87 = arith.mulf %86, %85 : vector<128x128xf32>
    %cst_35 = arith.constant 0.797884583 : f32
    %88 = vector.broadcast %cst_35 : f32 to vector<128x128xf32>
    %89 = arith.addf %88, %87 : vector<128x128xf32>
    %90 = arith.mulf %84, %89 : vector<128x128xf32>
    %91 = math.tanh %90 : vector<128x128xf32>
    %cst_36 = arith.constant 5.000000e-01 : f32
    %92 = vector.broadcast %cst_36 : f32 to vector<128x128xf32>
    %93 = arith.mulf %92, %91 : vector<128x128xf32>
    %cst_37 = arith.constant 5.000000e-01 : f32
    %94 = vector.broadcast %cst_37 : f32 to vector<128x128xf32>
    %95 = arith.addf %93, %94 : vector<128x128xf32>
    %96 = arith.mulf %84, %95 : vector<128x128xf32>
    %c5 = arith.constant 5 : index
    %c0_38 = arith.constant 0 : index
    %c0_39 = arith.constant 0 : index
    %97 = vector.load %arg2[%c5, %c0_38, %c0_39] : memref<7x128x128xbf16, #tpu.memory_space<vmem>>, vector<1x128x128xbf16>
    %98 = vector.shape_cast %97 : vector<1x128x128xbf16> to vector<128x128xbf16>
    %99 = vector.extract_strided_slice %1 {offsets = [5, 0], sizes = [1, 128], strides = [1, 1]} : vector<8x128xf32> to vector<1x128xf32>
    %100 = arith.truncf %96 : vector<128x128xf32> to vector<128x128xbf16>
    %cst_40 = arith.constant dense<0.000000e+00> : vector<128x128xf32>
    %101 = tpu.matmul %100, %98, %cst_40 {dimension_numbers = #tpu.dot_dimension_numbers<[1], [0], [0], [1], [0, 0, 1, 1], [], []>} : vector<128x128xbf16>, vector<128x128xbf16>, vector<128x128xf32> -> vector<128x128xf32>
    %102 = vector.broadcast %99 : vector<1x128xf32> to vector<128x128xf32>
    %103 = arith.addf %101, %102 : vector<128x128xf32>
    %104 = arith.mulf %103, %103 : vector<128x128xf32>
    %cst_41 = arith.constant 0.0356774069 : f32
    %105 = vector.broadcast %cst_41 : f32 to vector<128x128xf32>
    %106 = arith.mulf %105, %104 : vector<128x128xf32>
    %cst_42 = arith.constant 0.797884583 : f32
    %107 = vector.broadcast %cst_42 : f32 to vector<128x128xf32>
    %108 = arith.addf %107, %106 : vector<128x128xf32>
    %109 = arith.mulf %103, %108 : vector<128x128xf32>
    %110 = math.tanh %109 : vector<128x128xf32>
    %cst_43 = arith.constant 5.000000e-01 : f32
    %111 = vector.broadcast %cst_43 : f32 to vector<128x128xf32>
    %112 = arith.mulf %111, %110 : vector<128x128xf32>
    %cst_44 = arith.constant 5.000000e-01 : f32
    %113 = vector.broadcast %cst_44 : f32 to vector<128x128xf32>
    %114 = arith.addf %112, %113 : vector<128x128xf32>
    %115 = arith.mulf %103, %114 : vector<128x128xf32>
    %c6 = arith.constant 6 : index
    %c0_45 = arith.constant 0 : index
    %c0_46 = arith.constant 0 : index
    %116 = vector.load %arg2[%c6, %c0_45, %c0_46] : memref<7x128x128xbf16, #tpu.memory_space<vmem>>, vector<1x128x128xbf16>
    %117 = vector.shape_cast %116 : vector<1x128x128xbf16> to vector<128x128xbf16>
    %118 = vector.extract_strided_slice %1 {offsets = [6, 0], sizes = [1, 128], strides = [1, 1]} : vector<8x128xf32> to vector<1x128xf32>
    %119 = arith.truncf %115 : vector<128x128xf32> to vector<128x128xbf16>
    %cst_47 = arith.constant dense<0.000000e+00> : vector<128x128xf32>
    %120 = tpu.matmul %119, %117, %cst_47 {dimension_numbers = #tpu.dot_dimension_numbers<[1], [0], [0], [1], [0, 0, 1, 1], [], []>} : vector<128x128xbf16>, vector<128x128xbf16>, vector<128x128xf32> -> vector<128x128xf32>
    %121 = vector.broadcast %118 : vector<1x128xf32> to vector<128x128xf32>
    %122 = arith.addf %120, %121 : vector<128x128xf32>
    %123 = arith.mulf %122, %122 : vector<128x128xf32>
    %cst_48 = arith.constant 0.0356774069 : f32
    %124 = vector.broadcast %cst_48 : f32 to vector<128x128xf32>
    %125 = arith.mulf %124, %123 : vector<128x128xf32>
    %cst_49 = arith.constant 0.797884583 : f32
    %126 = vector.broadcast %cst_49 : f32 to vector<128x128xf32>
    %127 = arith.addf %126, %125 : vector<128x128xf32>
    %128 = arith.mulf %122, %127 : vector<128x128xf32>
    %129 = math.tanh %128 : vector<128x128xf32>
    %cst_50 = arith.constant 5.000000e-01 : f32
    %130 = vector.broadcast %cst_50 : f32 to vector<128x128xf32>
    %131 = arith.mulf %130, %129 : vector<128x128xf32>
    %cst_51 = arith.constant 5.000000e-01 : f32
    %132 = vector.broadcast %cst_51 : f32 to vector<128x128xf32>
    %133 = arith.addf %131, %132 : vector<128x128xf32>
    %134 = arith.mulf %122, %133 : vector<128x128xf32>
    %c0_52 = arith.constant 0 : index
    %c0_53 = arith.constant 0 : index
    %135 = vector.load %arg4[%c0_52, %c0_53] : memref<128x128xf32, #tpu.memory_space<vmem>>, vector<128x128xf32>
    tpu.vector_store %arg4[%c0_52, %c0_53], %134 {strides = array<i32>} : memref<128x128xf32, #tpu.memory_space<vmem>>, vector<128x128xf32>,
    return
  }
  func.func @transform_0(%arg0: i32) -> (i32, i32) {
    %c0_i32 = arith.constant 0 : i32
    %c0_i32_0 = arith.constant 0 : i32
    return %arg0, %c0_i32 : i32, i32
  }
  func.func @transform_1(%arg0: i32) -> (i32, i32, i32) {
    %c0_i32 = arith.constant 0 : i32
    %c0_i32_0 = arith.constant 0 : i32
    %c0_i32_1 = arith.constant 0 : i32
    %c0_i32_2 = arith.constant 0 : i32
    return %c0_i32, %c0_i32_0, %c0_i32_1 : i32, i32, i32
  }
  func.func @transform_2(%arg0: i32) -> (i32, i32) {
    %c0_i32 = arith.constant 0 : i32
    %c0_i32_0 = arith.constant 0 : i32
    %c0_i32_1 = arith.constant 0 : i32
    return %c0_i32, %c0_i32_0 : i32, i32
  }
  func.func @transform_3(%arg0: i32) -> (i32, i32) {
    %c0_i32 = arith.constant 0 : i32
    %c0_i32_0 = arith.constant 0 : i32
    return %arg0, %c0_i32 : i32, i32
  }
}

</mosaic_0001>

<llo_original>
// kernel: model_forward.1
$region0: #{model_forward.1}
  #allocation0 [shape = 'u32[]', space=smem, size = 0x4, offset = 0x4, fixed_abs, tag = 'smem constant byte address 0x4 - core index']
  #allocation1 [shape = 'u32[144,128]{1,0:T(1,128)}', space=vmem, size = 0x12000, scoped, tag = 'internal scratch']
  %s0 = inlined_call_operand.vmem [shape: f32[128,128], index: 0, kind: input, shape index: {}]
  %s1 = inlined_call_operand.hbm [shape: bf16[7,128,128], index: 1, kind: input, shape index: {}]
  %s2 = inlined_call_operand.vmem [shape: f32[8,128], index: 2, kind: input, shape index: {}]
  %s3 = inlined_call_operand.vmem [shape: f32[128,128], index: 3, kind: output, shape index: {}]
  %s4 = sld [smem:[#allocation0]]
  $region26: #{model_forward.1} parent=0
    _
  %s6 = ssub.s32 1, %s4
  %s7 = scalar_select 0, %s6, %s4
  $region1: #{model_forward.1} parent=0
    #allocation2 [shape = 'u8[229376]{0}', space=vmem, size = 0x38000, scoped, tag = 'input window, operand 1, single buffered']
    #allocation3 [shape = 's32[1]{0}', space=sflag, size = 0x4, scoped, tag = 'scoped memory for model_forward.1']
    %8 = vsyncpa [#allocation3], 0
    // Predicated region
    $region2: #{model_forward.1} parent=1 // pred_check
      _
    $region3: #{model_forward.1} parent=1 // pred_check_branch
      %10 = sbr.rel (0) target = $region5
    $region4: #{model_forward.1} parent=1 // pred_region
      _
    $region5: #{model_forward.1} parent=1 // pred_fallthru
      _
    // Predicated region
    $region6: #{model_forward.1} parent=1 // pred_check
      _
    $region7: #{model_forward.1} parent=1 // pred_check_branch
      %12 = sbr.rel (0) target = $region9
    $region8: #{model_forward.1} parent=1 // pred_region
      %s14 = ssub.s32 7168, 7168
      %15 = vsyncadd [#allocation3], %s14
      %s16 = sshll.u32 [#allocation2], 4
      %s17 = int_to_ptr.vmem [resolvable:$true] %s16
      %22 = dma.hbm_to_vmem [thread:$0]  %s1, 7168, %s17, [#allocation3], 64, 64, 4
    $region9: #{model_forward.1} parent=1 // pred_fallthru
      _
    // Predicated region
    $region10: #{model_forward.1} parent=1 // pred_check
      _
    $region11: #{model_forward.1} parent=1 // pred_check_branch
      %24 = sbr.rel (0) target = $region13
    $region12: #{model_forward.1} parent=1 // pred_region
      _
    $region13: #{model_forward.1} parent=1 // pred_fallthru
      _
    // Predicated region
    $region14: #{model_forward.1} parent=1 // pred_check
      _
    $region15: #{model_forward.1} parent=1 // pred_check_branch
      %26 = sbr.rel (0) target = $region17
    $region16: #{model_forward.1} parent=1 // pred_region
      %27 = dma.done [#allocation3], 7168
    $region17: #{model_forward.1} parent=1 // pred_fallthru
      _
    %v29 = vld [vmem:[%s0] sm:$0xff]
    %v30 = vld [vmem:[%s0 + $0x8] sm:$0xff]
    %v31 = vld [vmem:[%s0 + $0x10] sm:$0xff]
    %v32 = vld [vmem:[%s0 + $0x18] sm:$0xff]
    %v33 = vld [vmem:[%s0 + $0x20] sm:$0xff]
    %v34 = vld [vmem:[%s0 + $0x28] sm:$0xff]
    %v35 = vld [vmem:[%s0 + $0x30] sm:$0xff]
    %v36 = vld [vmem:[%s0 + $0x38] sm:$0xff]
    %v37 = vld [vmem:[%s0 + $0x40] sm:$0xff]
    %v38 = vld [vmem:[%s0 + $0x48] sm:$0xff]
    %v39 = vld [vmem:[%s0 + $0x50] sm:$0xff]
    %v40 = vld [vmem:[%s0 + $0x58] sm:$0xff]
    %v41 = vld [vmem:[%s0 + $0x60] sm:$0xff]
    %v42 = vld [vmem:[%s0 + $0x68] sm:$0xff]
    %v43 = vld [vmem:[%s0 + $0x70] sm:$0xff]
    %v44 = vld [vmem:[%s0 + $0x78] sm:$0xff]
    %v45 = vld [vmem:[%s2] sm:$0xff]
    %v46 = vld [vmem:[#allocation2] sm:$0xf]
    %v47 = vld [vmem:[#allocation2 + $0x4] sm:$0xf]
    %v48 = vld [vmem:[#allocation2 + $0x8] sm:$0xf]
    %v49 = vld [vmem:[#allocation2 + $0xc] sm:$0xf]
    %v50 = vld [vmem:[#allocation2 + $0x10] sm:$0xf]
    %v51 = vld [vmem:[#allocation2 + $0x14] sm:$0xf]
    %v52 = vld [vmem:[#allocation2 + $0x18] sm:$0xf]
    %v53 = vld [vmem:[#allocation2 + $0x1c] sm:$0xf]
    %v54 = vld [vmem:[#allocation2 + $0x20] sm:$0xf]
    %v55 = vld [vmem:[#allocation2 + $0x24] sm:$0xf]
    %v56 = vld [vmem:[#allocation2 + $0x28] sm:$0xf]
    %v57 = vld [vmem:[#allocation2 + $0x2c] sm:$0xf]
    %v58 = vld [vmem:[#allocation2 + $0x30] sm:$0xf]
    %v59 = vld [vmem:[#allocation2 + $0x34] sm:$0xf]
    %v60 = vld [vmem:[#allocation2 + $0x38] sm:$0xf]
    %v61 = vld [vmem:[#allocation2 + $0x3c] sm:$0xf]
    %v62 = vpack.c.bf16 %v30, %v29
    %v63 = vpack.c.bf16 %v32, %v31
    %v64 = vpack.c.bf16 %v34, %v33
    %v65 = vpack.c.bf16 %v36, %v35
    %v66 = vpack.c.bf16 %v38, %v37
    %v67 = vpack.c.bf16 %v40, %v39
    %v68 = vpack.c.bf16 %v42, %v41
    %v69 = vpack.c.bf16 %v44, %v43
    %v70 = vlaneseq
    %v71 = vshrl.u32 %v70, 7
    %v72 = vsub.s32 0, %v71
    %v73 = vrot.slane %v45, %v72
    %v90 = vunpack.c.l.b16 %v46
    %v91 = vunpack.c.l.b16 %v47
    %v92 = vunpack.c.l.b16 %v48
    %v93 = vunpack.c.l.b16 %v49
    %v94 = vunpack.c.l.b16 %v50
    %v95 = vunpack.c.l.b16 %v51
    %v96 = vunpack.c.l.b16 %v52
    %v97 = vunpack.c.l.b16 %v53
    %v98 = vunpack.c.l.b16 %v54
    %v99 = vunpack.c.l.b16 %v55
    %v100 = vunpack.c.l.b16 %v56
    %v101 = vunpack.c.l.b16 %v57
    %v102 = vunpack.c.l.b16 %v58
    %v103 = vunpack.c.l.b16 %v59
    %v104 = vunpack.c.l.b16 %v60
    %v105 = vunpack.c.l.b16 %v61
    %v106 = vpack.c.b16 %v91, %v90
    %v107 = vpack.c.b16 %v93, %v92
    %v108 = vpack.c.b16 %v95, %v94
    %v109 = vpack.c.b16 %v97, %v96
    %v110 = vpack.c.b16 %v99, %v98
    %v111 = vpack.c.b16 %v101, %v100
    %v112 = vpack.c.b16 %v103, %v102
    %v113 = vpack.c.b16 %v105, %v104
    %122 = vmatprep.subr.bf16.mxu0 0
    %123 = vmatpush1.bf16.msra.mxu0 %v113
    %124 = vmatprep.subr.bf16.mxu0 0
    %125 = vmatpush1.bf16.msra.mxu0 %v112
    %126 = vmatprep.subr.bf16.mxu0 0
    %127 = vmatpush1.bf16.msra.mxu0 %v111
    %128 = vmatprep.subr.bf16.mxu0 0
    %129 = vmatpush1.bf16.msra.mxu0 %v110
    %130 = vmatprep.subr.bf16.mxu0 0
    %131 = vmatpush1.bf16.msra.mxu0 %v109
    %132 = vmatprep.subr.bf16.mxu0 0
    %133 = vmatpush1.bf16.msra.mxu0 %v108
    %134 = vmatprep.subr.bf16.mxu0 0
    %135 = vmatpush1.bf16.msra.mxu0 %v107
    %136 = vmatprep.subr.bf16.mxu0 0
    %137 = vmatpush1.bf16.msra.mxu0 %v106
    %138 = vmatprep.subr.bf16.mxu0 0
    %139 = vmatpush2.bf16.msra.mxu0 0
    %140 = vmatprep.subr.bf16.mxu0 0
    %141 = vmatpush2.bf16.msra.mxu0 0
    %142 = vmatprep.subr.bf16.mxu0 0
    %143 = vmatpush2.bf16.msra.mxu0 0
    %144 = vmatprep.subr.bf16.mxu0 0
    %145 = vmatpush2.bf16.msra.mxu0 0
    %146 = vmatprep.subr.bf16.mxu0 0
    %147 = vmatpush2.bf16.msra.mxu0 0
    %148 = vmatprep.subr.bf16.mxu0 0
    %149 = vmatpush2.bf16.msra.mxu0 0
    %150 = vmatprep.subr.bf16.mxu0 0
    %151 = vmatpush2.bf16.msra.mxu0 0
    %152 = vmatprep.subr.bf16.mxu0 0
    %153 = vmatpush2.bf16.msra.mxu0 0
    %154 = vmatprep.mubr.bf16.mxu0 0
    %155 = vmatmul.mubr.bf16.gmra.mxu0 %v62
    %v156 = vpop.f32.mrf.mxu0
    %v157 = vadd.f32 %v73, %v156
    %v158 = vpop.f32.mrf.mxu0
    %v159 = vpop.f32.mrf.mxu0
    %v160 = vadd.f32 %v73, %v159
    %v161 = vpop.f32.mrf.mxu0
    %162 = vmatprep.mubr.bf16.mxu0 0
    %163 = vmatmul.mubr.bf16.gmra.mxu0 %v63
    %v164 = vpop.f32.mrf.mxu0
    %v165 = vadd.f32 %v73, %v164
    %v166 = vpop.f32.mrf.mxu0
    %v167 = vpop.f32.mrf.mxu0
    %v168 = vadd.f32 %v73, %v167
    %v169 = vpop.f32.mrf.mxu0
    %170 = vmatprep.mubr.bf16.mxu0 0
    %171 = vmatmul.mubr.bf16.gmra.mxu0 %v64
    %v172 = vpop.f32.mrf.mxu0
    %v173 = vadd.f32 %v73, %v172
    %v174 = vpop.f32.mrf.mxu0
    %v175 = vpop.f32.mrf.mxu0
    %v176 = vadd.f32 %v73, %v175
    %v177 = vpop.f32.mrf.mxu0
    %178 = vmatprep.mubr.bf16.mxu0 0
    %179 = vmatmul.mubr.bf16.gmra.mxu0 %v65
    %v180 = vpop.f32.mrf.mxu0
    %v181 = vadd.f32 %v73, %v180
    %v182 = vpop.f32.mrf.mxu0
    %v183 = vpop.f32.mrf.mxu0
    %v184 = vadd.f32 %v73, %v183
    %v185 = vpop.f32.mrf.mxu0
    %186 = vmatprep.mubr.bf16.mxu0 0
    %187 = vmatmul.mubr.bf16.gmra.mxu0 %v66
    %v188 = vpop.f32.mrf.mxu0
    %v189 = vadd.f32 %v73, %v188
    %v190 = vpop.f32.mrf.mxu0
    %v191 = vpop.f32.mrf.mxu0
    %v192 = vadd.f32 %v73, %v191
    %v193 = vpop.f32.mrf.mxu0
    %194 = vmatprep.mubr.bf16.mxu0 0
    %195 = vmatmul.mubr.bf16.gmra.mxu0 %v67
    %v196 = vpop.f32.mrf.mxu0
    %v197 = vadd.f32 %v73, %v196
    %v198 = vpop.f32.mrf.mxu0
    %v199 = vpop.f32.mrf.mxu0
    %v200 = vadd.f32 %v73, %v199
    %v201 = vpop.f32.mrf.mxu0
    %202 = vmatprep.mubr.bf16.mxu0 0
    %203 = vmatmul.mubr.bf16.gmra.mxu0 %v68
    %v204 = vpop.f32.mrf.mxu0
    %v205 = vadd.f32 %v73, %v204
    %v206 = vpop.f32.mrf.mxu0
    %v207 = vpop.f32.mrf.mxu0
    %v208 = vadd.f32 %v73, %v207
    %v209 = vpop.f32.mrf.mxu0
    %210 = vmatprep.mubr.bf16.mxu0 0
    %211 = vmatmul.mubr.bf16.gmra.mxu0 %v69
    %v212 = vpop.f32.mrf.mxu0
    %v213 = vadd.f32 %v73, %v212
    %v214 = vpop.f32.mrf.mxu0
    %v215 = vpop.f32.mrf.mxu0
    %v216 = vadd.f32 %v73, %v215
    %v217 = vpop.f32.mrf.mxu0
    %218 = vdwg.mxu0
    %v219 = vmul.f32 %v157, %v157
    %v220 = vmul.f32 %v160, %v160
    %v221 = vmul.f32 %v165, %v165
    %v222 = vmul.f32 %v168, %v168
    %v223 = vmul.f32 %v173, %v173
    %v224 = vmul.f32 %v176, %v176
    %v225 = vmul.f32 %v181, %v181
    %v226 = vmul.f32 %v184, %v184
    %v227 = vmul.f32 %v189, %v189
    %v228 = vmul.f32 %v192, %v192
    %v229 = vmul.f32 %v197, %v197
    %v230 = vmul.f32 %v200, %v200
    %v231 = vmul.f32 %v205, %v205
    %v232 = vmul.f32 %v208, %v208
    %v233 = vmul.f32 %v213, %v213
    %v234 = vmul.f32 %v216, %v216
    %v235 = vmul.f32 %v219, 0.035677407
    %v236 = vmul.f32 %v220, 0.035677407
    %v237 = vmul.f32 %v221, 0.035677407
    %v238 = vmul.f32 %v222, 0.035677407
    %v239 = vmul.f32 %v223, 0.035677407
    %v240 = vmul.f32 %v224, 0.035677407
    %v241 = vmul.f32 %v225, 0.035677407
    %v242 = vmul.f32 %v226, 0.035677407
    %v243 = vmul.f32 %v227, 0.035677407
    %v244 = vmul.f32 %v228, 0.035677407
    %v245 = vmul.f32 %v229, 0.035677407
    %v246 = vmul.f32 %v230, 0.035677407
    %v247 = vmul.f32 %v231, 0.035677407
    %v248 = vmul.f32 %v232, 0.035677407
    %v249 = vmul.f32 %v233, 0.035677407
    %v250 = vmul.f32 %v234, 0.035677407
    %v251 = vadd.f32 %v235, 0.7978846
    %v252 = vadd.f32 %v236, 0.7978846
    %v253 = vadd.f32 %v237, 0.7978846
    %v254 = vadd.f32 %v238, 0.7978846
    %v255 = vadd.f32 %v239, 0.7978846
    %v256 = vadd.f32 %v240, 0.7978846
    %v257 = vadd.f32 %v241, 0.7978846
    %v258 = vadd.f32 %v242, 0.7978846
    %v259 = vadd.f32 %v243, 0.7978846
    %v260 = vadd.f32 %v244, 0.7978846
    %v261 = vadd.f32 %v245, 0.7978846
    %v262 = vadd.f32 %v246, 0.7978846
    %v263 = vadd.f32 %v247, 0.7978846
    %v264 = vadd.f32 %v248, 0.7978846
    %v265 = vadd.f32 %v249, 0.7978846
    %v266 = vadd.f32 %v250, 0.7978846
    %v267 = vmul.f32 %v157, %v251
    %v268 = vmul.f32 %v160, %v252
    %v269 = vmul.f32 %v165, %v253
    %v270 = vmul.f32 %v168, %v254
    %v271 = vmul.f32 %v173, %v255
    %v272 = vmul.f32 %v176, %v256
    %v273 = vmul.f32 %v181, %v257
    %v274 = vmul.f32 %v184, %v258
    %v275 = vmul.f32 %v189, %v259
    %v276 = vmul.f32 %v192, %v260
    %v277 = vmul.f32 %v197, %v261
    %v278 = vmul.f32 %v200, %v262
    %v279 = vmul.f32 %v205, %v263
    %v280 = vmul.f32 %v208, %v264
    %v281 = vmul.f32 %v213, %v265
    %v282 = vmul.f32 %v216, %v266
    %v283 = vtanh.pop %v267
    %v284 = vtanh.pop %v268
    %v285 = vtanh.pop %v269
    %v286 = vtanh.pop %v270
    %v287 = vtanh.pop %v271
    %v288 = vtanh.pop %v272
    %v289 = vtanh.pop %v273
    %v290 = vtanh.pop %v274
    %v291 = vtanh.pop %v275
    %v292 = vtanh.pop %v276
    %v293 = vtanh.pop %v277
    %v294 = vtanh.pop %v278
    %v295 = vtanh.pop %v279
    %v296 = vtanh.pop %v280
    %v297 = vtanh.pop %v281
    %v298 = vtanh.pop %v282
    %v299 = vmul.f32 %v283, 0.5
    %v300 = vmul.f32 %v284, 0.5
    %v301 = vmul.f32 %v285, 0.5
    %v302 = vmul.f32 %v286, 0.5
    %v303 = vmul.f32 %v287, 0.5
    %v304 = vmul.f32 %v288, 0.5
    %v305 = vmul.f32 %v289, 0.5
    %v306 = vmul.f32 %v290, 0.5
    %v307 = vmul.f32 %v291, 0.5
    %v308 = vmul.f32 %v292, 0.5
    %v309 = vmul.f32 %v293, 0.5
    %v310 = vmul.f32 %v294, 0.5
    %v311 = vmul.f32 %v295, 0.5
    %v312 = vmul.f32 %v296, 0.5
    %v313 = vmul.f32 %v297, 0.5
    %v314 = vmul.f32 %v298, 0.5
    %v315 = vadd.f32 %v299, 0.5
    %v316 = vadd.f32 %v300, 0.5
    %v317 = vadd.f32 %v301, 0.5
    %v318 = vadd.f32 %v302, 0.5
    %v319 = vadd.f32 %v303, 0.5
    %v320 = vadd.f32 %v304, 0.5
    %v321 = vadd.f32 %v305, 0.5
    %v322 = vadd.f32 %v306, 0.5
    %v323 = vadd.f32 %v307, 0.5
    %v324 = vadd.f32 %v308, 0.5
    %v325 = vadd.f32 %v309, 0.5
    %v326 = vadd.f32 %v310, 0.5
    %v327 = vadd.f32 %v311, 0.5
    %v328 = vadd.f32 %v312, 0.5
    %v329 = vadd.f32 %v313, 0.5
    %v330 = vadd.f32 %v314, 0.5
    %v331 = vmul.f32 %v157, %v315
    %v332 = vmul.f32 %v160, %v316
    %v333 = vmul.f32 %v165, %v317
    %v334 = vmul.f32 %v168, %v318
    %v335 = vmul.f32 %v173, %v319
    %v336 = vmul.f32 %v176, %v320
    %v337 = vmul.f32 %v181, %v321
    %v338 = vmul.f32 %v184, %v322
    %v339 = vmul.f32 %v189, %v323
    %v340 = vmul.f32 %v192, %v324
    %v341 = vmul.f32 %v197, %v325
    %v342 = vmul.f32 %v200, %v326
    %v343 = vmul.f32 %v205, %v327
    %v344 = vmul.f32 %v208, %v328
    %v345 = vmul.f32 %v213, %v329
    %v346 = vmul.f32 %v216, %v330
    %s347 = scalar_lea.vmem [#allocation2], 64
    %v348 = vld [vmem:[%s347] sm:$0xf]
    %v349 = vld [vmem:[%s347 + $0x4] sm:$0xf]
    %v350 = vld [vmem:[%s347 + $0x8] sm:$0xf]
    %v351 = vld [vmem:[%s347 + $0xc] sm:$0xf]
    %v352 = vld [vmem:[%s347 + $0x10] sm:$0xf]
    %v353 = vld [vmem:[%s347 + $0x14] sm:$0xf]
    %v354 = vld [vmem:[%s347 + $0x18] sm:$0xf]
    %v355 = vld [vmem:[%s347 + $0x1c] sm:$0xf]
    %v356 = vld [vmem:[%s347 + $0x20] sm:$0xf]
    %v357 = vld [vmem:[%s347 + $0x24] sm:$0xf]
    %v358 = vld [vmem:[%s347 + $0x28] sm:$0xf]
    %v359 = vld [vmem:[%s347 + $0x2c] sm:$0xf]
    %v360 = vld [vmem:[%s347 + $0x30] sm:$0xf]
    %v361 = vld [vmem:[%s347 + $0x34] sm:$0xf]
    %v362 = vld [vmem:[%s347 + $0x38] sm:$0xf]
    %v363 = vld [vmem:[%s347 + $0x3c] sm:$0xf]
    %v364 = vpack.c.bf16 %v332, %v331
    %v365 = vpack.c.bf16 %v334, %v333
    %v366 = vpack.c.bf16 %v336, %v335
    %v367 = vpack.c.bf16 %v338, %v337
    %v368 = vpack.c.bf16 %v340, %v339
    %v369 = vpack.c.bf16 %v342, %v341
    %v370 = vpack.c.bf16 %v344, %v343
    %v371 = vpack.c.bf16 %v346, %v345
    %v372 = vlaneseq
    %v373 = vshrl.u32 %v372, 7
    %v374 = vsub.s32 1, %v373
    %v375 = vrot.slane %v45, %v374
    %v392 = vunpack.c.l.b16 %v348
    %v393 = vunpack.c.l.b16 %v349
    %v394 = vunpack.c.l.b16 %v350
    %v395 = vunpack.c.l.b16 %v351
    %v396 = vunpack.c.l.b16 %v352
    %v397 = vunpack.c.l.b16 %v353
    %v398 = vunpack.c.l.b16 %v354
    %v399 = vunpack.c.l.b16 %v355
    %v400 = vunpack.c.l.b16 %v356
    %v401 = vunpack.c.l.b16 %v357
    %v402 = vunpack.c.l.b16 %v358
    %v403 = vunpack.c.l.b16 %v359
    %v404 = vunpack.c.l.b16 %v360
    %v405 = vunpack.c.l.b16 %v361
    %v406 = vunpack.c.l.b16 %v362
    %v407 = vunpack.c.l.b16 %v363
    %v408 = vpack.c.b16 %v393, %v392
    %v409 = vpack.c.b16 %v395, %v394
    %v410 = vpack.c.b16 %v397, %v396
    %v411 = vpack.c.b16 %v399, %v398
    %v412 = vpack.c.b16 %v401, %v400
    %v413 = vpack.c.b16 %v403, %v402
    %v414 = vpack.c.b16 %v405, %v404
    %v415 = vpack.c.b16 %v407, %v406
    %424 = vmatprep.subr.bf16.mxu0 0
    %425 = vmatpush1.bf16.msra.mxu0 %v415
    %426 = vmatprep.subr.bf16.mxu0 0
    %427 = vmatpush1.bf16.msra.mxu0 %v414
    %428 = vmatprep.subr.bf16.mxu0 0
    %429 = vmatpush1.bf16.msra.mxu0 %v413
    %430 = vmatprep.subr.bf16.mxu0 0
    %431 = vmatpush1.bf16.msra.mxu0 %v412
    %432 = vmatprep.subr.bf16.mxu0 0
    %433 = vmatpush1.bf16.msra.mxu0 %v411
    %434 = vmatprep.subr.bf16.mxu0 0
    %435 = vmatpush1.bf16.msra.mxu0 %v410
    %436 = vmatprep.subr.bf16.mxu0 0
    %437 = vmatpush1.bf16.msra.mxu0 %v409
    %438 = vmatprep.subr.bf16.mxu0 0
    %439 = vmatpush1.bf16.msra.mxu0 %v408
    %440 = vmatprep.subr.bf16.mxu0 0
    %441 = vmatpush2.bf16.msra.mxu0 0
    %442 = vmatprep.subr.bf16.mxu0 0
    %443 = vmatpush2.bf16.msra.mxu0 0
    %444 = vmatprep.subr.bf16.mxu0 0
    %445 = vmatpush2.bf16.msra.mxu0 0
    %446 = vmatprep.subr.bf16.mxu0 0
    %447 = vmatpush2.bf16.msra.mxu0 0
    %448 = vmatprep.subr.bf16.mxu0 0
    %449 = vmatpush2.bf16.msra.mxu0 0
    %450 = vmatprep.subr.bf16.mxu0 0
    %451 = vmatpush2.bf16.msra.mxu0 0
    %452 = vmatprep.subr.bf16.mxu0 0
    %453 = vmatpush2.bf16.msra.mxu0 0
    %454 = vmatprep.subr.bf16.mxu0 0
    %455 = vmatpush2.bf16.msra.mxu0 0
    %456 = vmatprep.mubr.bf16.mxu0 0
    %457 = vmatmul.mubr.bf16.gmra.mxu0 %v364
    %v458 = vpop.f32.mrf.mxu0
    %v459 = vadd.f32 %v375, %v458
    %v460 = vpop.f32.mrf.mxu0
    %v461 = vpop.f32.mrf.mxu0
    %v462 = vadd.f32 %v375, %v461
    %v463 = vpop.f32.mrf.mxu0
    %464 = vmatprep.mubr.bf16.mxu0 0
    %465 = vmatmul.mubr.bf16.gmra.mxu0 %v365
    %v466 = vpop.f32.mrf.mxu0
    %v467 = vadd.f32 %v375, %v466
    %v468 = vpop.f32.mrf.mxu0
    %v469 = vpop.f32.mrf.mxu0
    %v470 = vadd.f32 %v375, %v469
    %v471 = vpop.f32.mrf.mxu0
    %472 = vmatprep.mubr.bf16.mxu0 0
    %473 = vmatmul.mubr.bf16.gmra.mxu0 %v366
    %v474 = vpop.f32.mrf.mxu0
    %v475 = vadd.f32 %v375, %v474
    %v476 = vpop.f32.mrf.mxu0
    %v477 = vpop.f32.mrf.mxu0
    %v478 = vadd.f32 %v375, %v477
    %v479 = vpop.f32.mrf.mxu0
    %480 = vmatprep.mubr.bf16.mxu0 0
    %481 = vmatmul.mubr.bf16.gmra.mxu0 %v367
    %v482 = vpop.f32.mrf.mxu0
    %v483 = vadd.f32 %v375, %v482
    %v484 = vpop.f32.mrf.mxu0
    %v485 = vpop.f32.mrf.mxu0
    %v486 = vadd.f32 %v375, %v485
    %v487 = vpop.f32.mrf.mxu0
    %488 = vmatprep.mubr.bf16.mxu0 0
    %489 = vmatmul.mubr.bf16.gmra.mxu0 %v368
    %v490 = vpop.f32.mrf.mxu0
    %v491 = vadd.f32 %v375, %v490
    %v492 = vpop.f32.mrf.mxu0
    %v493 = vpop.f32.mrf.mxu0
    %v494 = vadd.f32 %v375, %v493
    %v495 = vpop.f32.mrf.mxu0
    %496 = vmatprep.mubr.bf16.mxu0 0
    %497 = vmatmul.mubr.bf16.gmra.mxu0 %v369
    %v498 = vpop.f32.mrf.mxu0
    %v499 = vadd.f32 %v375, %v498
    %v500 = vpop.f32.mrf.mxu0
    %v501 = vpop.f32.mrf.mxu0
    %v502 = vadd.f32 %v375, %v501
    %v503 = vpop.f32.mrf.mxu0
    %504 = vmatprep.mubr.bf16.mxu0 0
    %505 = vmatmul.mubr.bf16.gmra.mxu0 %v370
    %v506 = vpop.f32.mrf.mxu0
    %v507 = vadd.f32 %v375, %v506
    %v508 = vpop.f32.mrf.mxu0
    %v509 = vpop.f32.mrf.mxu0
    %v510 = vadd.f32 %v375, %v509
    %v511 = vpop.f32.mrf.mxu0
    %512 = vmatprep.mubr.bf16.mxu0 0
    %513 = vmatmul.mubr.bf16.gmra.mxu0 %v371
    %v514 = vpop.f32.mrf.mxu0
    %v515 = vadd.f32 %v375, %v514
    %v516 = vpop.f32.mrf.mxu0
    %v517 = vpop.f32.mrf.mxu0
    %v518 = vadd.f32 %v375, %v517
    %v519 = vpop.f32.mrf.mxu0
    %520 = vdwg.mxu0
    %v521 = vmul.f32 %v459, %v459
    %v522 = vmul.f32 %v462, %v462
    %v523 = vmul.f32 %v467, %v467
    %v524 = vmul.f32 %v470, %v470
    %v525 = vmul.f32 %v475, %v475
    %v526 = vmul.f32 %v478, %v478
    %v527 = vmul.f32 %v483, %v483
    %v528 = vmul.f32 %v486, %v486
    %v529 = vmul.f32 %v491, %v491
    %v530 = vmul.f32 %v494, %v494
    %v531 = vmul.f32 %v499, %v499
    %v532 = vmul.f32 %v502, %v502
    %v533 = vmul.f32 %v507, %v507
    %v534 = vmul.f32 %v510, %v510
    %v535 = vmul.f32 %v515, %v515
    %v536 = vmul.f32 %v518, %v518
    %v537 = vmul.f32 %v521, 0.035677407
    %v538 = vmul.f32 %v522, 0.035677407
    %v539 = vmul.f32 %v523, 0.035677407
    %v540 = vmul.f32 %v524, 0.035677407
    %v541 = vmul.f32 %v525, 0.035677407
    %v542 = vmul.f32 %v526, 0.035677407
    %v543 = vmul.f32 %v527, 0.035677407
    %v544 = vmul.f32 %v528, 0.035677407
    %v545 = vmul.f32 %v529, 0.035677407
    %v546 = vmul.f32 %v530, 0.035677407
    %v547 = vmul.f32 %v531, 0.035677407
    %v548 = vmul.f32 %v532, 0.035677407
    %v549 = vmul.f32 %v533, 0.035677407
    %v550 = vmul.f32 %v534, 0.035677407
    %v551 = vmul.f32 %v535, 0.035677407
    %v552 = vmul.f32 %v536, 0.035677407
    %v553 = vadd.f32 %v537, 0.7978846
    %v554 = vadd.f32 %v538, 0.7978846
    %v555 = vadd.f32 %v539, 0.7978846
    %v556 = vadd.f32 %v540, 0.7978846
    %v557 = vadd.f32 %v541, 0.7978846
    %v558 = vadd.f32 %v542, 0.7978846
    %v559 = vadd.f32 %v543, 0.7978846
    %v560 = vadd.f32 %v544, 0.7978846
    %v561 = vadd.f32 %v545, 0.7978846
    %v562 = vadd.f32 %v546, 0.7978846
    %v563 = vadd.f32 %v547, 0.7978846
    %v564 = vadd.f32 %v548, 0.7978846
    %v565 = vadd.f32 %v549, 0.7978846
    %v566 = vadd.f32 %v550, 0.7978846
    %v567 = vadd.f32 %v551, 0.7978846
    %v568 = vadd.f32 %v552, 0.7978846
    %v569 = vmul.f32 %v459, %v553
    %v570 = vmul.f32 %v462, %v554
    %v571 = vmul.f32 %v467, %v555
    %v572 = vmul.f32 %v470, %v556
    %v573 = vmul.f32 %v475, %v557
    %v574 = vmul.f32 %v478, %v558
    %v575 = vmul.f32 %v483, %v559
    %v576 = vmul.f32 %v486, %v560
    %v577 = vmul.f32 %v491, %v561
    %v578 = vmul.f32 %v494, %v562
    %v579 = vmul.f32 %v499, %v563
    %v580 = vmul.f32 %v502, %v564
    %v581 = vmul.f32 %v507, %v565
    %v582 = vmul.f32 %v510, %v566
    %v583 = vmul.f32 %v515, %v567
    %v584 = vmul.f32 %v518, %v568
    %v585 = vtanh.pop %v569
    %v586 = vtanh.pop %v570
    %v587 = vtanh.pop %v571
    %v588 = vtanh.pop %v572
    %v589 = vtanh.pop %v573
    %v590 = vtanh.pop %v574
    %v591 = vtanh.pop %v575
    %v592 = vtanh.pop %v576
    %v593 = vtanh.pop %v577
    %v594 = vtanh.pop %v578
    %v595 = vtanh.pop %v579
    %v596 = vtanh.pop %v580
    %v597 = vtanh.pop %v581
    %v598 = vtanh.pop %v582
    %v599 = vtanh.pop %v583
    %v600 = vtanh.pop %v584
    %v601 = vmul.f32 %v585, 0.5
    %v602 = vmul.f32 %v586, 0.5
    %v603 = vmul.f32 %v587, 0.5
    %v604 = vmul.f32 %v588, 0.5
    %v605 = vmul.f32 %v589, 0.5
    %v606 = vmul.f32 %v590, 0.5
    %v607 = vmul.f32 %v591, 0.5
    %v608 = vmul.f32 %v592, 0.5
    %v609 = vmul.f32 %v593, 0.5
    %v610 = vmul.f32 %v594, 0.5
    %v611 = vmul.f32 %v595, 0.5
    %v612 = vmul.f32 %v596, 0.5
    %v613 = vmul.f32 %v597, 0.5
    %v614 = vmul.f32 %v598, 0.5
    %v615 = vmul.f32 %v599, 0.5
    %v616 = vmul.f32 %v600, 0.5
    %v617 = vadd.f32 %v601, 0.5
    %v618 = vadd.f32 %v602, 0.5
    %v619 = vadd.f32 %v603, 0.5
    %v620 = vadd.f32 %v604, 0.5
    %v621 = vadd.f32 %v605, 0.5
    %v622 = vadd.f32 %v606, 0.5
    %v623 = vadd.f32 %v607, 0.5
    %v624 = vadd.f32 %v608, 0.5
    %v625 = vadd.f32 %v609, 0.5
    %v626 = vadd.f32 %v610, 0.5
    %v627 = vadd.f32 %v611, 0.5
    %v628 = vadd.f32 %v612, 0.5
    %v629 = vadd.f32 %v613, 0.5
    %v630 = vadd.f32 %v614, 0.5
    %v631 = vadd.f32 %v615, 0.5
    %v632 = vadd.f32 %v616, 0.5
    %v633 = vmul.f32 %v459, %v617
    %v634 = vmul.f32 %v462, %v618
    %v635 = vmul.f32 %v467, %v619
    %v636 = vmul.f32 %v470, %v620
    %v637 = vmul.f32 %v475, %v621
    %v638 = vmul.f32 %v478, %v622
    %v639 = vmul.f32 %v483, %v623
    %v640 = vmul.f32 %v486, %v624
    %v641 = vmul.f32 %v491, %v625
    %v642 = vmul.f32 %v494, %v626
    %v643 = vmul.f32 %v499, %v627
    %v644 = vmul.f32 %v502, %v628
    %v645 = vmul.f32 %v507, %v629
    %v646 = vmul.f32 %v510, %v630
    %v647 = vmul.f32 %v515, %v631
    %v648 = vmul.f32 %v518, %v632
    %s649 = scalar_lea.vmem [#allocation2], 128
    %v650 = vld [vmem:[%s649] sm:$0xf]
    %v651 = vld [vmem:[%s649 + $0x4] sm:$0xf]
    %v652 = vld [vmem:[%s649 + $0x8] sm:$0xf]
    %v653 = vld [vmem:[%s649 + $0xc] sm:$0xf]
    %v654 = vld [vmem:[%s649 + $0x10] sm:$0xf]
    %v655 = vld [vmem:[%s649 + $0x14] sm:$0xf]
    %v656 = vld [vmem:[%s649 + $0x18] sm:$0xf]
    %v657 = vld [vmem:[%s649 + $0x1c] sm:$0xf]
    %v658 = vld [vmem:[%s649 + $0x20] sm:$0xf]
    %v659 = vld [vmem:[%s649 + $0x24] sm:$0xf]
    %v660 = vld [vmem:[%s649 + $0x28] sm:$0xf]
    %v661 = vld [vmem:[%s649 + $0x2c] sm:$0xf]
    %v662 = vld [vmem:[%s649 + $0x30] sm:$0xf]
    %v663 = vld [vmem:[%s649 + $0x34] sm:$0xf]
    %v664 = vld [vmem:[%s649 + $0x38] sm:$0xf]
    %v665 = vld [vmem:[%s649 + $0x3c] sm:$0xf]
    %v666 = vpack.c.bf16 %v634, %v633
    %v667 = vpack.c.bf16 %v636, %v635
    %v668 = vpack.c.bf16 %v638, %v637
    %v669 = vpack.c.bf16 %v640, %v639
    %v670 = vpack.c.bf16 %v642, %v641
    %v671 = vpack.c.bf16 %v644, %v643
    %v672 = vpack.c.bf16 %v646, %v645
    %v673 = vpack.c.bf16 %v648, %v647
    %v674 = vlaneseq
    %v675 = vshrl.u32 %v674, 7
    %v676 = vsub.s32 2, %v675
    %v677 = vrot.slane %v45, %v676
    %v694 = vunpack.c.l.b16 %v650
    %v695 = vunpack.c.l.b16 %v651
    %v696 = vunpack.c.l.b16 %v652
    %v697 = vunpack.c.l.b16 %v653
    %v698 = vunpack.c.l.b16 %v654
    %v699 = vunpack.c.l.b16 %v655
    %v700 = vunpack.c.l.b16 %v656
    %v701 = vunpack.c.l.b16 %v657
    %v702 = vunpack.c.l.b16 %v658
    %v703 = vunpack.c.l.b16 %v659
    %v704 = vunpack.c.l.b16 %v660
    %v705 = vunpack.c.l.b16 %v661
    %v706 = vunpack.c.l.b16 %v662
    %v707 = vunpack.c.l.b16 %v663
    %v708 = vunpack.c.l.b16 %v664
    %v709 = vunpack.c.l.b16 %v665
    %v710 = vpack.c.b16 %v695, %v694
    %v711 = vpack.c.b16 %v697, %v696
    %v712 = vpack.c.b16 %v699, %v698
    %v713 = vpack.c.b16 %v701, %v700
    %v714 = vpack.c.b16 %v703, %v702
    %v715 = vpack.c.b16 %v705, %v704
    %v716 = vpack.c.b16 %v707, %v706
    %v717 = vpack.c.b16 %v709, %v708
    %726 = vmatprep.subr.bf16.mxu0 0
    %727 = vmatpush1.bf16.msra.mxu0 %v717
    %728 = vmatprep.subr.bf16.mxu0 0
    %729 = vmatpush1.bf16.msra.mxu0 %v716
    %730 = vmatprep.subr.bf16.mxu0 0
    %731 = vmatpush1.bf16.msra.mxu0 %v715
    %732 = vmatprep.subr.bf16.mxu0 0
    %733 = vmatpush1.bf16.msra.mxu0 %v714
    %734 = vmatprep.subr.bf16.mxu0 0
    %735 = vmatpush1.bf16.msra.mxu0 %v713
    %736 = vmatprep.subr.bf16.mxu0 0
    %737 = vmatpush1.bf16.msra.mxu0 %v712
    %738 = vmatprep.subr.bf16.mxu0 0
    %739 = vmatpush1.bf16.msra.mxu0 %v711
    %740 = vmatprep.subr.bf16.mxu0 0
    %741 = vmatpush1.bf16.msra.mxu0 %v710
    %742 = vmatprep.subr.bf16.mxu0 0
    %743 = vmatpush2.bf16.msra.mxu0 0
    %744 = vmatprep.subr.bf16.mxu0 0
    %745 = vmatpush2.bf16.msra.mxu0 0
    %746 = vmatprep.subr.bf16.mxu0 0
    %747 = vmatpush2.bf16.msra.mxu0 0
    %748 = vmatprep.subr.bf16.mxu0 0
    %749 = vmatpush2.bf16.msra.mxu0 0
    %750 = vmatprep.subr.bf16.mxu0 0
    %751 = vmatpush2.bf16.msra.mxu0 0
    %752 = vmatprep.subr.bf16.mxu0 0
    %753 = vmatpush2.bf16.msra.mxu0 0
    %754 = vmatprep.subr.bf16.mxu0 0
    %755 = vmatpush2.bf16.msra.mxu0 0
    %756 = vmatprep.subr.bf16.mxu0 0
    %757 = vmatpush2.bf16.msra.mxu0 0
    %758 = vmatprep.mubr.bf16.mxu0 0
    %759 = vmatmul.mubr.bf16.gmra.mxu0 %v666
    %v760 = vpop.f32.mrf.mxu0
    %v761 = vadd.f32 %v677, %v760
    %v762 = vpop.f32.mrf.mxu0
    %v763 = vpop.f32.mrf.mxu0
    %v764 = vadd.f32 %v677, %v763
    %v765 = vpop.f32.mrf.mxu0
    %766 = vmatprep.mubr.bf16.mxu0 0
    %767 = vmatmul.mubr.bf16.gmra.mxu0 %v667
    %v768 = vpop.f32.mrf.mxu0
    %v769 = vadd.f32 %v677, %v768
    %v770 = vpop.f32.mrf.mxu0
    %v771 = vpop.f32.mrf.mxu0
    %v772 = vadd.f32 %v677, %v771
    %v773 = vpop.f32.mrf.mxu0
    %774 = vmatprep.mubr.bf16.mxu0 0
    %775 = vmatmul.mubr.bf16.gmra.mxu0 %v668
    %v776 = vpop.f32.mrf.mxu0
    %v777 = vadd.f32 %v677, %v776
    %v778 = vpop.f32.mrf.mxu0
    %v779 = vpop.f32.mrf.mxu0
    %v780 = vadd.f32 %v677, %v779
    %v781 = vpop.f32.mrf.mxu0
    %782 = vmatprep.mubr.bf16.mxu0 0
    %783 = vmatmul.mubr.bf16.gmra.mxu0 %v669
    %v784 = vpop.f32.mrf.mxu0
    %v785 = vadd.f32 %v677, %v784
    %v786 = vpop.f32.mrf.mxu0
    %v787 = vpop.f32.mrf.mxu0
    %v788 = vadd.f32 %v677, %v787
    %v789 = vpop.f32.mrf.mxu0
    %790 = vmatprep.mubr.bf16.mxu0 0
    %791 = vmatmul.mubr.bf16.gmra.mxu0 %v670
    %v792 = vpop.f32.mrf.mxu0
    %v793 = vadd.f32 %v677, %v792
    %v794 = vpop.f32.mrf.mxu0
    %v795 = vpop.f32.mrf.mxu0
    %v796 = vadd.f32 %v677, %v795
    %v797 = vpop.f32.mrf.mxu0
    %798 = vmatprep.mubr.bf16.mxu0 0
    %799 = vmatmul.mubr.bf16.gmra.mxu0 %v671
    %v800 = vpop.f32.mrf.mxu0
    %v801 = vadd.f32 %v677, %v800
    %v802 = vpop.f32.mrf.mxu0
    %v803 = vpop.f32.mrf.mxu0
    %v804 = vadd.f32 %v677, %v803
    %v805 = vpop.f32.mrf.mxu0
    %806 = vmatprep.mubr.bf16.mxu0 0
    %807 = vmatmul.mubr.bf16.gmra.mxu0 %v672
    %v808 = vpop.f32.mrf.mxu0
    %v809 = vadd.f32 %v677, %v808
    %v810 = vpop.f32.mrf.mxu0
    %v811 = vpop.f32.mrf.mxu0
    %v812 = vadd.f32 %v677, %v811
    %v813 = vpop.f32.mrf.mxu0
    %814 = vmatprep.mubr.bf16.mxu0 0
    %815 = vmatmul.mubr.bf16.gmra.mxu0 %v673
    %v816 = vpop.f32.mrf.mxu0
    %v817 = vadd.f32 %v677, %v816
    %v818 = vpop.f32.mrf.mxu0
    %v819 = vpop.f32.mrf.mxu0
    %v820 = vadd.f32 %v677, %v819
    %v821 = vpop.f32.mrf.mxu0
    %822 = vdwg.mxu0
    %v823 = vmul.f32 %v761, %v761
    %v824 = vmul.f32 %v764, %v764
    %v825 = vmul.f32 %v769, %v769
    %v826 = vmul.f32 %v772, %v772
    %v827 = vmul.f32 %v777, %v777
    %v828 = vmul.f32 %v780, %v780
    %v829 = vmul.f32 %v785, %v785
    %v830 = vmul.f32 %v788, %v788
    %v831 = vmul.f32 %v793, %v793
    %v832 = vmul.f32 %v796, %v796
    %v833 = vmul.f32 %v801, %v801
    %v834 = vmul.f32 %v804, %v804
    %v835 = vmul.f32 %v809, %v809
    %v836 = vmul.f32 %v812, %v812
    %v837 = vmul.f32 %v817, %v817
    %v838 = vmul.f32 %v820, %v820
    %v839 = vmul.f32 %v823, 0.035677407
    %v840 = vmul.f32 %v824, 0.035677407
    %v841 = vmul.f32 %v825, 0.035677407
    %v842 = vmul.f32 %v826, 0.035677407
    %v843 = vmul.f32 %v827, 0.035677407
    %v844 = vmul.f32 %v828, 0.035677407
    %v845 = vmul.f32 %v829, 0.035677407
    %v846 = vmul.f32 %v830, 0.035677407
    %v847 = vmul.f32 %v831, 0.035677407
    %v848 = vmul.f32 %v832, 0.035677407
    %v849 = vmul.f32 %v833, 0.035677407
    %v850 = vmul.f32 %v834, 0.035677407
    %v851 = vmul.f32 %v835, 0.035677407
    %v852 = vmul.f32 %v836, 0.035677407
    %v853 = vmul.f32 %v837, 0.035677407
    %v854 = vmul.f32 %v838, 0.035677407
    %v855 = vadd.f32 %v839, 0.7978846
    %v856 = vadd.f32 %v840, 0.7978846
    %v857 = vadd.f32 %v841, 0.7978846
    %v858 = vadd.f32 %v842, 0.7978846
    %v859 = vadd.f32 %v843, 0.7978846
    %v860 = vadd.f32 %v844, 0.7978846
    %v861 = vadd.f32 %v845, 0.7978846
    %v862 = vadd.f32 %v846, 0.7978846
    %v863 = vadd.f32 %v847, 0.7978846
    %v864 = vadd.f32 %v848, 0.7978846
    %v865 = vadd.f32 %v849, 0.7978846
    %v866 = vadd.f32 %v850, 0.7978846
    %v867 = vadd.f32 %v851, 0.7978846
    %v868 = vadd.f32 %v852, 0.7978846
    %v869 = vadd.f32 %v853, 0.7978846
    %v870 = vadd.f32 %v854, 0.7978846
    %v871 = vmul.f32 %v761, %v855
    %v872 = vmul.f32 %v764, %v856
    %v873 = vmul.f32 %v769, %v857
    %v874 = vmul.f32 %v772, %v858
    %v875 = vmul.f32 %v777, %v859
    %v876 = vmul.f32 %v780, %v860
    %v877 = vmul.f32 %v785, %v861
    %v878 = vmul.f32 %v788, %v862
    %v879 = vmul.f32 %v793, %v863
    %v880 = vmul.f32 %v796, %v864
    %v881 = vmul.f32 %v801, %v865
    %v882 = vmul.f32 %v804, %v866
    %v883 = vmul.f32 %v809, %v867
    %v884 = vmul.f32 %v812, %v868
    %v885 = vmul.f32 %v817, %v869
    %v886 = vmul.f32 %v820, %v870
    %v887 = vtanh.pop %v871
    %v888 = vtanh.pop %v872
    %v889 = vtanh.pop %v873
    %v890 = vtanh.pop %v874
    %v891 = vtanh.pop %v875
    %v892 = vtanh.pop %v876
    %v893 = vtanh.pop %v877
    %v894 = vtanh.pop %v878
    %v895 = vtanh.pop %v879
    %v896 = vtanh.pop %v880
    %v897 = vtanh.pop %v881
    %v898 = vtanh.pop %v882
    %v899 = vtanh.pop %v883
    %v900 = vtanh.pop %v884
    %v901 = vtanh.pop %v885
    %v902 = vtanh.pop %v886
    %v903 = vmul.f32 %v887, 0.5
    %v904 = vmul.f32 %v888, 0.5
    %v905 = vmul.f32 %v889, 0.5
    %v906 = vmul.f32 %v890, 0.5
    %v907 = vmul.f32 %v891, 0.5
    %v908 = vmul.f32 %v892, 0.5
    %v909 = vmul.f32 %v893, 0.5
    %v910 = vmul.f32 %v894, 0.5
    %v911 = vmul.f32 %v895, 0.5
    %v912 = vmul.f32 %v896, 0.5
    %v913 = vmul.f32 %v897, 0.5
    %v914 = vmul.f32 %v898, 0.5
    %v915 = vmul.f32 %v899, 0.5
    %v916 = vmul.f32 %v900, 0.5
    %v917 = vmul.f32 %v901, 0.5
    %v918 = vmul.f32 %v902, 0.5
    %v919 = vadd.f32 %v903, 0.5
    %v920 = vadd.f32 %v904, 0.5
    %v921 = vadd.f32 %v905, 0.5
    %v922 = vadd.f32 %v906, 0.5
    %v923 = vadd.f32 %v907, 0.5
    %v924 = vadd.f32 %v908, 0.5
    %v925 = vadd.f32 %v909, 0.5
    %v926 = vadd.f32 %v910, 0.5
    %v927 = vadd.f32 %v911, 0.5
    %v928 = vadd.f32 %v912, 0.5
    %v929 = vadd.f32 %v913, 0.5
    %v930 = vadd.f32 %v914, 0.5
    %v931 = vadd.f32 %v915, 0.5
    %v932 = vadd.f32 %v916, 0.5
    %v933 = vadd.f32 %v917, 0.5
    %v934 = vadd.f32 %v918, 0.5
    %v935 = vmul.f32 %v761, %v919
    %v936 = vmul.f32 %v764, %v920
    %v937 = vmul.f32 %v769, %v921
    %v938 = vmul.f32 %v772, %v922
    %v939 = vmul.f32 %v777, %v923
    %v940 = vmul.f32 %v780, %v924
    %v941 = vmul.f32 %v785, %v925
    %v942 = vmul.f32 %v788, %v926
    %v943 = vmul.f32 %v793, %v927
    %v944 = vmul.f32 %v796, %v928
    %v945 = vmul.f32 %v801, %v929
    %v946 = vmul.f32 %v804, %v930
    %v947 = vmul.f32 %v809, %v931
    %v948 = vmul.f32 %v812, %v932
    %v949 = vmul.f32 %v817, %v933
    %v950 = vmul.f32 %v820, %v934
    %s951 = scalar_lea.vmem [#allocation2], 192
    %v952 = vld [vmem:[%s951] sm:$0xf]
    %v953 = vld [vmem:[%s951 + $0x4] sm:$0xf]
    %v954 = vld [vmem:[%s951 + $0x8] sm:$0xf]
    %v955 = vld [vmem:[%s951 + $0xc] sm:$0xf]
    %v956 = vld [vmem:[%s951 + $0x10] sm:$0xf]
    %v957 = vld [vmem:[%s951 + $0x14] sm:$0xf]
    %v958 = vld [vmem:[%s951 + $0x18] sm:$0xf]
    %v959 = vld [vmem:[%s951 + $0x1c] sm:$0xf]
    %v960 = vld [vmem:[%s951 + $0x20] sm:$0xf]
    %v961 = vld [vmem:[%s951 + $0x24] sm:$0xf]
    %v962 = vld [vmem:[%s951 + $0x28] sm:$0xf]
    %v963 = vld [vmem:[%s951 + $0x2c] sm:$0xf]
    %v964 = vld [vmem:[%s951 + $0x30] sm:$0xf]
    %v965 = vld [vmem:[%s951 + $0x34] sm:$0xf]
    %v966 = vld [vmem:[%s951 + $0x38] sm:$0xf]
    %v967 = vld [vmem:[%s951 + $0x3c] sm:$0xf]
    %v968 = vpack.c.bf16 %v936, %v935
    %v969 = vpack.c.bf16 %v938, %v937
    %v970 = vpack.c.bf16 %v940, %v939
    %v971 = vpack.c.bf16 %v942, %v941
    %v972 = vpack.c.bf16 %v944, %v943
    %v973 = vpack.c.bf16 %v946, %v945
    %v974 = vpack.c.bf16 %v948, %v947
    %v975 = vpack.c.bf16 %v950, %v949
    %v976 = vlaneseq
    %v977 = vshrl.u32 %v976, 7
    %v978 = vsub.s32 3, %v977
    %v979 = vrot.slane %v45, %v978
    %v996 = vunpack.c.l.b16 %v952
    %v997 = vunpack.c.l.b16 %v953
    %v998 = vunpack.c.l.b16 %v954
    %v999 = vunpack.c.l.b16 %v955
    %v1000 = vunpack.c.l.b16 %v956
    %v1001 = vunpack.c.l.b16 %v957
    %v1002 = vunpack.c.l.b16 %v958
    %v1003 = vunpack.c.l.b16 %v959
    %v1004 = vunpack.c.l.b16 %v960
    %v1005 = vunpack.c.l.b16 %v961
    %v1006 = vunpack.c.l.b16 %v962
    %v1007 = vunpack.c.l.b16 %v963
    %v1008 = vunpack.c.l.b16 %v964
    %v1009 = vunpack.c.l.b16 %v965
    %v1010 = vunpack.c.l.b16 %v966
    %v1011 = vunpack.c.l.b16 %v967
    %v1012 = vpack.c.b16 %v997, %v996
    %v1013 = vpack.c.b16 %v999, %v998
    %v1014 = vpack.c.b16 %v1001, %v1000
    %v1015 = vpack.c.b16 %v1003, %v1002
    %v1016 = vpack.c.b16 %v1005, %v1004
    %v1017 = vpack.c.b16 %v1007, %v1006
    %v1018 = vpack.c.b16 %v1009, %v1008
    %v1019 = vpack.c.b16 %v1011, %v1010
    %1028 = vmatprep.subr.bf16.mxu0 0
    %1029 = vmatpush1.bf16.msra.mxu0 %v1019
    %1030 = vmatprep.subr.bf16.mxu0 0
    %1031 = vmatpush1.bf16.msra.mxu0 %v1018
    %1032 = vmatprep.subr.bf16.mxu0 0
    %1033 = vmatpush1.bf16.msra.mxu0 %v1017
    %1034 = vmatprep.subr.bf16.mxu0 0
    %1035 = vmatpush1.bf16.msra.mxu0 %v1016
    %1036 = vmatprep.subr.bf16.mxu0 0
    %1037 = vmatpush1.bf16.msra.mxu0 %v1015
    %1038 = vmatprep.subr.bf16.mxu0 0
    %1039 = vmatpush1.bf16.msra.mxu0 %v1014
    %1040 = vmatprep.subr.bf16.mxu0 0
    %1041 = vmatpush1.bf16.msra.mxu0 %v1013
    %1042 = vmatprep.subr.bf16.mxu0 0
    %1043 = vmatpush1.bf16.msra.mxu0 %v1012
    %1044 = vmatprep.subr.bf16.mxu0 0
    %1045 = vmatpush2.bf16.msra.mxu0 0
    %1046 = vmatprep.subr.bf16.mxu0 0
    %1047 = vmatpush2.bf16.msra.mxu0 0
    %1048 = vmatprep.subr.bf16.mxu0 0
    %1049 = vmatpush2.bf16.msra.mxu0 0
    %1050 = vmatprep.subr.bf16.mxu0 0
    %1051 = vmatpush2.bf16.msra.mxu0 0
    %1052 = vmatprep.subr.bf16.mxu0 0
    %1053 = vmatpush2.bf16.msra.mxu0 0
    %1054 = vmatprep.subr.bf16.mxu0 0
    %1055 = vmatpush2.bf16.msra.mxu0 0
    %1056 = vmatprep.subr.bf16.mxu0 0
    %1057 = vmatpush2.bf16.msra.mxu0 0
    %1058 = vmatprep.subr.bf16.mxu0 0
    %1059 = vmatpush2.bf16.msra.mxu0 0
    %1060 = vmatprep.mubr.bf16.mxu0 0
    %1061 = vmatmul.mubr.bf16.gmra.mxu0 %v968
    %v1062 = vpop.f32.mrf.mxu0
    %v1063 = vadd.f32 %v979, %v1062
    %v1064 = vpop.f32.mrf.mxu0
    %v1065 = vpop.f32.mrf.mxu0
    %v1066 = vadd.f32 %v979, %v1065
    %v1067 = vpop.f32.mrf.mxu0
    %1068 = vmatprep.mubr.bf16.mxu0 0
    %1069 = vmatmul.mubr.bf16.gmra.mxu0 %v969
    %v1070 = vpop.f32.mrf.mxu0
    %v1071 = vadd.f32 %v979, %v1070
    %v1072 = vpop.f32.mrf.mxu0
    %v1073 = vpop.f32.mrf.mxu0
    %v1074 = vadd.f32 %v979, %v1073
    %v1075 = vpop.f32.mrf.mxu0
    %1076 = vmatprep.mubr.bf16.mxu0 0
    %1077 = vmatmul.mubr.bf16.gmra.mxu0 %v970
    %v1078 = vpop.f32.mrf.mxu0
    %v1079 = vadd.f32 %v979, %v1078
    %v1080 = vpop.f32.mrf.mxu0
    %v1081 = vpop.f32.mrf.mxu0
    %v1082 = vadd.f32 %v979, %v1081
    %v1083 = vpop.f32.mrf.mxu0
    %1084 = vmatprep.mubr.bf16.mxu0 0
    %1085 = vmatmul.mubr.bf16.gmra.mxu0 %v971
    %v1086 = vpop.f32.mrf.mxu0
    %v1087 = vadd.f32 %v979, %v1086
    %v1088 = vpop.f32.mrf.mxu0
    %v1089 = vpop.f32.mrf.mxu0
    %v1090 = vadd.f32 %v979, %v1089
    %v1091 = vpop.f32.mrf.mxu0
    %1092 = vmatprep.mubr.bf16.mxu0 0
    %1093 = vmatmul.mubr.bf16.gmra.mxu0 %v972
    %v1094 = vpop.f32.mrf.mxu0
    %v1095 = vadd.f32 %v979, %v1094
    %v1096 = vpop.f32.mrf.mxu0
    %v1097 = vpop.f32.mrf.mxu0
    %v1098 = vadd.f32 %v979, %v1097
    %v1099 = vpop.f32.mrf.mxu0
    %1100 = vmatprep.mubr.bf16.mxu0 0
    %1101 = vmatmul.mubr.bf16.gmra.mxu0 %v973
    %v1102 = vpop.f32.mrf.mxu0
    %v1103 = vadd.f32 %v979, %v1102
    %v1104 = vpop.f32.mrf.mxu0
    %v1105 = vpop.f32.mrf.mxu0
    %v1106 = vadd.f32 %v979, %v1105
    %v1107 = vpop.f32.mrf.mxu0
    %1108 = vmatprep.mubr.bf16.mxu0 0
    %1109 = vmatmul.mubr.bf16.gmra.mxu0 %v974
    %v1110 = vpop.f32.mrf.mxu0
    %v1111 = vadd.f32 %v979, %v1110
    %v1112 = vpop.f32.mrf.mxu0
    %v1113 = vpop.f32.mrf.mxu0
    %v1114 = vadd.f32 %v979, %v1113
    %v1115 = vpop.f32.mrf.mxu0
    %1116 = vmatprep.mubr.bf16.mxu0 0
    %1117 = vmatmul.mubr.bf16.gmra.mxu0 %v975
    %v1118 = vpop.f32.mrf.mxu0
    %v1119 = vadd.f32 %v979, %v1118
    %v1120 = vpop.f32.mrf.mxu0
    %v1121 = vpop.f32.mrf.mxu0
    %v1122 = vadd.f32 %v979, %v1121
    %v1123 = vpop.f32.mrf.mxu0
    %1124 = vdwg.mxu0
    %v1125 = vmul.f32 %v1063, %v1063
    %v1126 = vmul.f32 %v1066, %v1066
    %v1127 = vmul.f32 %v1071, %v1071
    %v1128 = vmul.f32 %v1074, %v1074
    %v1129 = vmul.f32 %v1079, %v1079
    %v1130 = vmul.f32 %v1082, %v1082
    %v1131 = vmul.f32 %v1087, %v1087
    %v1132 = vmul.f32 %v1090, %v1090
    %v1133 = vmul.f32 %v1095, %v1095
    %v1134 = vmul.f32 %v1098, %v1098
    %v1135 = vmul.f32 %v1103, %v1103
    %v1136 = vmul.f32 %v1106, %v1106
    %v1137 = vmul.f32 %v1111, %v1111
    %v1138 = vmul.f32 %v1114, %v1114
    %v1139 = vmul.f32 %v1119, %v1119
    %v1140 = vmul.f32 %v1122, %v1122
    %v1141 = vmul.f32 %v1125, 0.035677407
    %v1142 = vmul.f32 %v1126, 0.035677407
    %v1143 = vmul.f32 %v1127, 0.035677407
    %v1144 = vmul.f32 %v1128, 0.035677407
    %v1145 = vmul.f32 %v1129, 0.035677407
    %v1146 = vmul.f32 %v1130, 0.035677407
    %v1147 = vmul.f32 %v1131, 0.035677407
    %v1148 = vmul.f32 %v1132, 0.035677407
    %v1149 = vmul.f32 %v1133, 0.035677407
    %v1150 = vmul.f32 %v1134, 0.035677407
    %v1151 = vmul.f32 %v1135, 0.035677407
    %v1152 = vmul.f32 %v1136, 0.035677407
    %v1153 = vmul.f32 %v1137, 0.035677407
    %v1154 = vmul.f32 %v1138, 0.035677407
    %v1155 = vmul.f32 %v1139, 0.035677407
    %v1156 = vmul.f32 %v1140, 0.035677407
    %v1157 = vadd.f32 %v1141, 0.7978846
    %v1158 = vadd.f32 %v1142, 0.7978846
    %v1159 = vadd.f32 %v1143, 0.7978846
    %v1160 = vadd.f32 %v1144, 0.7978846
    %v1161 = vadd.f32 %v1145, 0.7978846
    %v1162 = vadd.f32 %v1146, 0.7978846
    %v1163 = vadd.f32 %v1147, 0.7978846
    %v1164 = vadd.f32 %v1148, 0.7978846
    %v1165 = vadd.f32 %v1149, 0.7978846
    %v1166 = vadd.f32 %v1150, 0.7978846
    %v1167 = vadd.f32 %v1151, 0.7978846
    %v1168 = vadd.f32 %v1152, 0.7978846
    %v1169 = vadd.f32 %v1153, 0.7978846
    %v1170 = vadd.f32 %v1154, 0.7978846
    %v1171 = vadd.f32 %v1155, 0.7978846
    %v1172 = vadd.f32 %v1156, 0.7978846
    %v1173 = vmul.f32 %v1063, %v1157
    %v1174 = vmul.f32 %v1066, %v1158
    %v1175 = vmul.f32 %v1071, %v1159
    %v1176 = vmul.f32 %v1074, %v1160
    %v1177 = vmul.f32 %v1079, %v1161
    %v1178 = vmul.f32 %v1082, %v1162
    %v1179 = vmul.f32 %v1087, %v1163
    %v1180 = vmul.f32 %v1090, %v1164
    %v1181 = vmul.f32 %v1095, %v1165
    %v1182 = vmul.f32 %v1098, %v1166
    %v1183 = vmul.f32 %v1103, %v1167
    %v1184 = vmul.f32 %v1106, %v1168
    %v1185 = vmul.f32 %v1111, %v1169
    %v1186 = vmul.f32 %v1114, %v1170
    %v1187 = vmul.f32 %v1119, %v1171
    %v1188 = vmul.f32 %v1122, %v1172
    %v1189 = vtanh.pop %v1173
    %v1190 = vtanh.pop %v1174
    %v1191 = vtanh.pop %v1175
    %v1192 = vtanh.pop %v1176
    %v1193 = vtanh.pop %v1177
    %v1194 = vtanh.pop %v1178
    %v1195 = vtanh.pop %v1179
    %v1196 = vtanh.pop %v1180
    %v1197 = vtanh.pop %v1181
    %v1198 = vtanh.pop %v1182
    %v1199 = vtanh.pop %v1183
    %v1200 = vtanh.pop %v1184
    %v1201 = vtanh.pop %v1185
    %v1202 = vtanh.pop %v1186
    %v1203 = vtanh.pop %v1187
    %v1204 = vtanh.pop %v1188
    %v1205 = vmul.f32 %v1189, 0.5
    %v1206 = vmul.f32 %v1190, 0.5
    %v1207 = vmul.f32 %v1191, 0.5
    %v1208 = vmul.f32 %v1192, 0.5
    %v1209 = vmul.f32 %v1193, 0.5
    %v1210 = vmul.f32 %v1194, 0.5
    %v1211 = vmul.f32 %v1195, 0.5
    %v1212 = vmul.f32 %v1196, 0.5
    %v1213 = vmul.f32 %v1197, 0.5
    %v1214 = vmul.f32 %v1198, 0.5
    %v1215 = vmul.f32 %v1199, 0.5
    %v1216 = vmul.f32 %v1200, 0.5
    %v1217 = vmul.f32 %v1201, 0.5
    %v1218 = vmul.f32 %v1202, 0.5
    %v1219 = vmul.f32 %v1203, 0.5
    %v1220 = vmul.f32 %v1204, 0.5
    %v1221 = vadd.f32 %v1205, 0.5
    %v1222 = vadd.f32 %v1206, 0.5
    %v1223 = vadd.f32 %v1207, 0.5
    %v1224 = vadd.f32 %v1208, 0.5
    %v1225 = vadd.f32 %v1209, 0.5
    %v1226 = vadd.f32 %v1210, 0.5
    %v1227 = vadd.f32 %v1211, 0.5
    %v1228 = vadd.f32 %v1212, 0.5
    %v1229 = vadd.f32 %v1213, 0.5
    %v1230 = vadd.f32 %v1214, 0.5
    %v1231 = vadd.f32 %v1215, 0.5
    %v1232 = vadd.f32 %v1216, 0.5
    %v1233 = vadd.f32 %v1217, 0.5
    %v1234 = vadd.f32 %v1218, 0.5
    %v1235 = vadd.f32 %v1219, 0.5
    %v1236 = vadd.f32 %v1220, 0.5
    %v1237 = vmul.f32 %v1063, %v1221
    %v1238 = vmul.f32 %v1066, %v1222
    %v1239 = vmul.f32 %v1071, %v1223
    %v1240 = vmul.f32 %v1074, %v1224
    %v1241 = vmul.f32 %v1079, %v1225
    %v1242 = vmul.f32 %v1082, %v1226
    %v1243 = vmul.f32 %v1087, %v1227
    %v1244 = vmul.f32 %v1090, %v1228
    %v1245 = vmul.f32 %v1095, %v1229
    %v1246 = vmul.f32 %v1098, %v1230
    %v1247 = vmul.f32 %v1103, %v1231
    %v1248 = vmul.f32 %v1106, %v1232
    %v1249 = vmul.f32 %v1111, %v1233
    %v1250 = vmul.f32 %v1114, %v1234
    %v1251 = vmul.f32 %v1119, %v1235
    %v1252 = vmul.f32 %v1122, %v1236
    %s1253 = scalar_lea.vmem [#allocation2], 256
    %v1254 = vld [vmem:[%s1253] sm:$0xf]
    %v1255 = vld [vmem:[%s1253 + $0x4] sm:$0xf]
    %v1256 = vld [vmem:[%s1253 + $0x8] sm:$0xf]
    %v1257 = vld [vmem:[%s1253 + $0xc] sm:$0xf]
    %v1258 = vld [vmem:[%s1253 + $0x10] sm:$0xf]
    %v1259 = vld [vmem:[%s1253 + $0x14] sm:$0xf]
    %v1260 = vld [vmem:[%s1253 + $0x18] sm:$0xf]
    %v1261 = vld [vmem:[%s1253 + $0x1c] sm:$0xf]
    %v1262 = vld [vmem:[%s1253 + $0x20] sm:$0xf]
    %v1263 = vld [vmem:[%s1253 + $0x24] sm:$0xf]
    %v1264 = vld [vmem:[%s1253 + $0x28] sm:$0xf]
    %v1265 = vld [vmem:[%s1253 + $0x2c] sm:$0xf]
    %v1266 = vld [vmem:[%s1253 + $0x30] sm:$0xf]
    %v1267 = vld [vmem:[%s1253 + $0x34] sm:$0xf]
    %v1268 = vld [vmem:[%s1253 + $0x38] sm:$0xf]
    %v1269 = vld [vmem:[%s1253 + $0x3c] sm:$0xf]
    %v1270 = vpack.c.bf16 %v1238, %v1237
    %v1271 = vpack.c.bf16 %v1240, %v1239
    %v1272 = vpack.c.bf16 %v1242, %v1241
    %v1273 = vpack.c.bf16 %v1244, %v1243
    %v1274 = vpack.c.bf16 %v1246, %v1245
    %v1275 = vpack.c.bf16 %v1248, %v1247
    %v1276 = vpack.c.bf16 %v1250, %v1249
    %v1277 = vpack.c.bf16 %v1252, %v1251
    %v1278 = vlaneseq
    %v1279 = vshrl.u32 %v1278, 7
    %v1280 = vsub.s32 4, %v1279
    %v1281 = vrot.slane %v45, %v1280
    %v1298 = vunpack.c.l.b16 %v1254
    %v1299 = vunpack.c.l.b16 %v1255
    %v1300 = vunpack.c.l.b16 %v1256
    %v1301 = vunpack.c.l.b16 %v1257
    %v1302 = vunpack.c.l.b16 %v1258
    %v1303 = vunpack.c.l.b16 %v1259
    %v1304 = vunpack.c.l.b16 %v1260
    %v1305 = vunpack.c.l.b16 %v1261
    %v1306 = vunpack.c.l.b16 %v1262
    %v1307 = vunpack.c.l.b16 %v1263
    %v1308 = vunpack.c.l.b16 %v1264
    %v1309 = vunpack.c.l.b16 %v1265
    %v1310 = vunpack.c.l.b16 %v1266
    %v1311 = vunpack.c.l.b16 %v1267
    %v1312 = vunpack.c.l.b16 %v1268
    %v1313 = vunpack.c.l.b16 %v1269
    %v1314 = vpack.c.b16 %v1299, %v1298
    %v1315 = vpack.c.b16 %v1301, %v1300
    %v1316 = vpack.c.b16 %v1303, %v1302
    %v1317 = vpack.c.b16 %v1305, %v1304
    %v1318 = vpack.c.b16 %v1307, %v1306
    %v1319 = vpack.c.b16 %v1309, %v1308
    %v1320 = vpack.c.b16 %v1311, %v1310
    %v1321 = vpack.c.b16 %v1313, %v1312
    %1330 = vmatprep.subr.bf16.mxu0 0
    %1331 = vmatpush1.bf16.msra.mxu0 %v1321
    %1332 = vmatprep.subr.bf16.mxu0 0
    %1333 = vmatpush1.bf16.msra.mxu0 %v1320
    %1334 = vmatprep.subr.bf16.mxu0 0
    %1335 = vmatpush1.bf16.msra.mxu0 %v1319
    %1336 = vmatprep.subr.bf16.mxu0 0
    %1337 = vmatpush1.bf16.msra.mxu0 %v1318
    %1338 = vmatprep.subr.bf16.mxu0 0
    %1339 = vmatpush1.bf16.msra.mxu0 %v1317
    %1340 = vmatprep.subr.bf16.mxu0 0
    %1341 = vmatpush1.bf16.msra.mxu0 %v1316
    %1342 = vmatprep.subr.bf16.mxu0 0
    %1343 = vmatpush1.bf16.msra.mxu0 %v1315
    %1344 = vmatprep.subr.bf16.mxu0 0
    %1345 = vmatpush1.bf16.msra.mxu0 %v1314
    %1346 = vmatprep.subr.bf16.mxu0 0
    %1347 = vmatpush2.bf16.msra.mxu0 0
    %1348 = vmatprep.subr.bf16.mxu0 0
    %1349 = vmatpush2.bf16.msra.mxu0 0
    %1350 = vmatprep.subr.bf16.mxu0 0
    %1351 = vmatpush2.bf16.msra.mxu0 0
    %1352 = vmatprep.subr.bf16.mxu0 0
    %1353 = vmatpush2.bf16.msra.mxu0 0
    %1354 = vmatprep.subr.bf16.mxu0 0
    %1355 = vmatpush2.bf16.msra.mxu0 0
    %1356 = vmatprep.subr.bf16.mxu0 0
    %1357 = vmatpush2.bf16.msra.mxu0 0
    %1358 = vmatprep.subr.bf16.mxu0 0
    %1359 = vmatpush2.bf16.msra.mxu0 0
    %1360 = vmatprep.subr.bf16.mxu0 0
    %1361 = vmatpush2.bf16.msra.mxu0 0
    %1362 = vmatprep.mubr.bf16.mxu0 0
    %1363 = vmatmul.mubr.bf16.gmra.mxu0 %v1270
    %v1364 = vpop.f32.mrf.mxu0
    %v1365 = vadd.f32 %v1281, %v1364
    %v1366 = vpop.f32.mrf.mxu0
    %v1367 = vpop.f32.mrf.mxu0
    %v1368 = vadd.f32 %v1281, %v1367
    %v1369 = vpop.f32.mrf.mxu0
    %1370 = vmatprep.mubr.bf16.mxu0 0
    %1371 = vmatmul.mubr.bf16.gmra.mxu0 %v1271
    %v1372 = vpop.f32.mrf.mxu0
    %v1373 = vadd.f32 %v1281, %v1372
    %v1374 = vpop.f32.mrf.mxu0
    %v1375 = vpop.f32.mrf.mxu0
    %v1376 = vadd.f32 %v1281, %v1375
    %v1377 = vpop.f32.mrf.mxu0
    %1378 = vmatprep.mubr.bf16.mxu0 0
    %1379 = vmatmul.mubr.bf16.gmra.mxu0 %v1272
    %v1380 = vpop.f32.mrf.mxu0
    %v1381 = vadd.f32 %v1281, %v1380
    %v1382 = vpop.f32.mrf.mxu0
    %v1383 = vpop.f32.mrf.mxu0
    %v1384 = vadd.f32 %v1281, %v1383
    %v1385 = vpop.f32.mrf.mxu0
    %1386 = vmatprep.mubr.bf16.mxu0 0
    %1387 = vmatmul.mubr.bf16.gmra.mxu0 %v1273
    %v1388 = vpop.f32.mrf.mxu0
    %v1389 = vadd.f32 %v1281, %v1388
    %v1390 = vpop.f32.mrf.mxu0
    %v1391 = vpop.f32.mrf.mxu0
    %v1392 = vadd.f32 %v1281, %v1391
    %v1393 = vpop.f32.mrf.mxu0
    %1394 = vmatprep.mubr.bf16.mxu0 0
    %1395 = vmatmul.mubr.bf16.gmra.mxu0 %v1274
    %v1396 = vpop.f32.mrf.mxu0
    %v1397 = vadd.f32 %v1281, %v1396
    %v1398 = vpop.f32.mrf.mxu0
    %v1399 = vpop.f32.mrf.mxu0
    %v1400 = vadd.f32 %v1281, %v1399
    %v1401 = vpop.f32.mrf.mxu0
    %1402 = vmatprep.mubr.bf16.mxu0 0
    %1403 = vmatmul.mubr.bf16.gmra.mxu0 %v1275
    %v1404 = vpop.f32.mrf.mxu0
    %v1405 = vadd.f32 %v1281, %v1404
    %v1406 = vpop.f32.mrf.mxu0
    %v1407 = vpop.f32.mrf.mxu0
    %v1408 = vadd.f32 %v1281, %v1407
    %v1409 = vpop.f32.mrf.mxu0
    %1410 = vmatprep.mubr.bf16.mxu0 0
    %1411 = vmatmul.mubr.bf16.gmra.mxu0 %v1276
    %v1412 = vpop.f32.mrf.mxu0
    %v1413 = vadd.f32 %v1281, %v1412
    %v1414 = vpop.f32.mrf.mxu0
    %v1415 = vpop.f32.mrf.mxu0
    %v1416 = vadd.f32 %v1281, %v1415
    %v1417 = vpop.f32.mrf.mxu0
    %1418 = vmatprep.mubr.bf16.mxu0 0
    %1419 = vmatmul.mubr.bf16.gmra.mxu0 %v1277
    %v1420 = vpop.f32.mrf.mxu0
    %v1421 = vadd.f32 %v1281, %v1420
    %v1422 = vpop.f32.mrf.mxu0
    %v1423 = vpop.f32.mrf.mxu0
    %v1424 = vadd.f32 %v1281, %v1423
    %v1425 = vpop.f32.mrf.mxu0
    %1426 = vdwg.mxu0
    %v1427 = vmul.f32 %v1365, %v1365
    %v1428 = vmul.f32 %v1368, %v1368
    %v1429 = vmul.f32 %v1373, %v1373
    %v1430 = vmul.f32 %v1376, %v1376
    %v1431 = vmul.f32 %v1381, %v1381
    %v1432 = vmul.f32 %v1384, %v1384
    %v1433 = vmul.f32 %v1389, %v1389
    %v1434 = vmul.f32 %v1392, %v1392
    %v1435 = vmul.f32 %v1397, %v1397
    %v1436 = vmul.f32 %v1400, %v1400
    %v1437 = vmul.f32 %v1405, %v1405
    %v1438 = vmul.f32 %v1408, %v1408
    %v1439 = vmul.f32 %v1413, %v1413
    %v1440 = vmul.f32 %v1416, %v1416
    %v1441 = vmul.f32 %v1421, %v1421
    %v1442 = vmul.f32 %v1424, %v1424
    %v1443 = vmul.f32 %v1427, 0.035677407
    %v1444 = vmul.f32 %v1428, 0.035677407
    %v1445 = vmul.f32 %v1429, 0.035677407
    %v1446 = vmul.f32 %v1430, 0.035677407
    %v1447 = vmul.f32 %v1431, 0.035677407
    %v1448 = vmul.f32 %v1432, 0.035677407
    %v1449 = vmul.f32 %v1433, 0.035677407
    %v1450 = vmul.f32 %v1434, 0.035677407
    %v1451 = vmul.f32 %v1435, 0.035677407
    %v1452 = vmul.f32 %v1436, 0.035677407
    %v1453 = vmul.f32 %v1437, 0.035677407
    %v1454 = vmul.f32 %v1438, 0.035677407
    %v1455 = vmul.f32 %v1439, 0.035677407
    %v1456 = vmul.f32 %v1440, 0.035677407
    %v1457 = vmul.f32 %v1441, 0.035677407
    %v1458 = vmul.f32 %v1442, 0.035677407
    %v1459 = vadd.f32 %v1443, 0.7978846
    %v1460 = vadd.f32 %v1444, 0.7978846
    %v1461 = vadd.f32 %v1445, 0.7978846
    %v1462 = vadd.f32 %v1446, 0.7978846
    %v1463 = vadd.f32 %v1447, 0.7978846
    %v1464 = vadd.f32 %v1448, 0.7978846
    %v1465 = vadd.f32 %v1449, 0.7978846
    %v1466 = vadd.f32 %v1450, 0.7978846
    %v1467 = vadd.f32 %v1451, 0.7978846
    %v1468 = vadd.f32 %v1452, 0.7978846
    %v1469 = vadd.f32 %v1453, 0.7978846
    %v1470 = vadd.f32 %v1454, 0.7978846
    %v1471 = vadd.f32 %v1455, 0.7978846
    %v1472 = vadd.f32 %v1456, 0.7978846
    %v1473 = vadd.f32 %v1457, 0.7978846
    %v1474 = vadd.f32 %v1458, 0.7978846
    %v1475 = vmul.f32 %v1365, %v1459
    %v1476 = vmul.f32 %v1368, %v1460
    %v1477 = vmul.f32 %v1373, %v1461
    %v1478 = vmul.f32 %v1376, %v1462
    %v1479 = vmul.f32 %v1381, %v1463
    %v1480 = vmul.f32 %v1384, %v1464
    %v1481 = vmul.f32 %v1389, %v1465
    %v1482 = vmul.f32 %v1392, %v1466
    %v1483 = vmul.f32 %v1397, %v1467
    %v1484 = vmul.f32 %v1400, %v1468
    %v1485 = vmul.f32 %v1405, %v1469
    %v1486 = vmul.f32 %v1408, %v1470
    %v1487 = vmul.f32 %v1413, %v1471
    %v1488 = vmul.f32 %v1416, %v1472
    %v1489 = vmul.f32 %v1421, %v1473
    %v1490 = vmul.f32 %v1424, %v1474
    %v1491 = vtanh.pop %v1475
    %v1492 = vtanh.pop %v1476
    %v1493 = vtanh.pop %v1477
    %v1494 = vtanh.pop %v1478
    %v1495 = vtanh.pop %v1479
    %v1496 = vtanh.pop %v1480
    %v1497 = vtanh.pop %v1481
    %v1498 = vtanh.pop %v1482
    %v1499 = vtanh.pop %v1483
    %v1500 = vtanh.pop %v1484
    %v1501 = vtanh.pop %v1485
    %v1502 = vtanh.pop %v1486
    %v1503 = vtanh.pop %v1487
    %v1504 = vtanh.pop %v1488
    %v1505 = vtanh.pop %v1489
    %v1506 = vtanh.pop %v1490
    %v1507 = vmul.f32 %v1491, 0.5
    %v1508 = vmul.f32 %v1492, 0.5
    %v1509 = vmul.f32 %v1493, 0.5
    %v1510 = vmul.f32 %v1494, 0.5
    %v1511 = vmul.f32 %v1495, 0.5
    %v1512 = vmul.f32 %v1496, 0.5
    %v1513 = vmul.f32 %v1497, 0.5
    %v1514 = vmul.f32 %v1498, 0.5
    %v1515 = vmul.f32 %v1499, 0.5
    %v1516 = vmul.f32 %v1500, 0.5
    %v1517 = vmul.f32 %v1501, 0.5
    %v1518 = vmul.f32 %v1502, 0.5
    %v1519 = vmul.f32 %v1503, 0.5
    %v1520 = vmul.f32 %v1504, 0.5
    %v1521 = vmul.f32 %v1505, 0.5
    %v1522 = vmul.f32 %v1506, 0.5
    %v1523 = vadd.f32 %v1507, 0.5
    %v1524 = vadd.f32 %v1508, 0.5
    %v1525 = vadd.f32 %v1509, 0.5
    %v1526 = vadd.f32 %v1510, 0.5
    %v1527 = vadd.f32 %v1511, 0.5
    %v1528 = vadd.f32 %v1512, 0.5
    %v1529 = vadd.f32 %v1513, 0.5
    %v1530 = vadd.f32 %v1514, 0.5
    %v1531 = vadd.f32 %v1515, 0.5
    %v1532 = vadd.f32 %v1516, 0.5
    %v1533 = vadd.f32 %v1517, 0.5
    %v1534 = vadd.f32 %v1518, 0.5
    %v1535 = vadd.f32 %v1519, 0.5
    %v1536 = vadd.f32 %v1520, 0.5
    %v1537 = vadd.f32 %v1521, 0.5
    %v1538 = vadd.f32 %v1522, 0.5
    %v1539 = vmul.f32 %v1365, %v1523
    %v1540 = vmul.f32 %v1368, %v1524
    %v1541 = vmul.f32 %v1373, %v1525
    %v1542 = vmul.f32 %v1376, %v1526
    %v1543 = vmul.f32 %v1381, %v1527
    %v1544 = vmul.f32 %v1384, %v1528
    %v1545 = vmul.f32 %v1389, %v1529
    %v1546 = vmul.f32 %v1392, %v1530
    %v1547 = vmul.f32 %v1397, %v1531
    %v1548 = vmul.f32 %v1400, %v1532
    %v1549 = vmul.f32 %v1405, %v1533
    %v1550 = vmul.f32 %v1408, %v1534
    %v1551 = vmul.f32 %v1413, %v1535
    %v1552 = vmul.f32 %v1416, %v1536
    %v1553 = vmul.f32 %v1421, %v1537
    %v1554 = vmul.f32 %v1424, %v1538
    %s1555 = scalar_lea.vmem [#allocation2], 320
    %v1556 = vld [vmem:[%s1555] sm:$0xf]
    %v1557 = vld [vmem:[%s1555 + $0x4] sm:$0xf]
    %v1558 = vld [vmem:[%s1555 + $0x8] sm:$0xf]
    %v1559 = vld [vmem:[%s1555 + $0xc] sm:$0xf]
    %v1560 = vld [vmem:[%s1555 + $0x10] sm:$0xf]
    %v1561 = vld [vmem:[%s1555 + $0x14] sm:$0xf]
    %v1562 = vld [vmem:[%s1555 + $0x18] sm:$0xf]
    %v1563 = vld [vmem:[%s1555 + $0x1c] sm:$0xf]
    %v1564 = vld [vmem:[%s1555 + $0x20] sm:$0xf]
    %v1565 = vld [vmem:[%s1555 + $0x24] sm:$0xf]
    %v1566 = vld [vmem:[%s1555 + $0x28] sm:$0xf]
    %v1567 = vld [vmem:[%s1555 + $0x2c] sm:$0xf]
    %v1568 = vld [vmem:[%s1555 + $0x30] sm:$0xf]
    %v1569 = vld [vmem:[%s1555 + $0x34] sm:$0xf]
    %v1570 = vld [vmem:[%s1555 + $0x38] sm:$0xf]
    %v1571 = vld [vmem:[%s1555 + $0x3c] sm:$0xf]
    %v1572 = vpack.c.bf16 %v1540, %v1539
    %v1573 = vpack.c.bf16 %v1542, %v1541
    %v1574 = vpack.c.bf16 %v1544, %v1543
    %v1575 = vpack.c.bf16 %v1546, %v1545
    %v1576 = vpack.c.bf16 %v1548, %v1547
    %v1577 = vpack.c.bf16 %v1550, %v1549
    %v1578 = vpack.c.bf16 %v1552, %v1551
    %v1579 = vpack.c.bf16 %v1554, %v1553
    %v1580 = vlaneseq
    %v1581 = vshrl.u32 %v1580, 7
    %v1582 = vsub.s32 5, %v1581
    %v1583 = vrot.slane %v45, %v1582
    %v1600 = vunpack.c.l.b16 %v1556
    %v1601 = vunpack.c.l.b16 %v1557
    %v1602 = vunpack.c.l.b16 %v1558
    %v1603 = vunpack.c.l.b16 %v1559
    %v1604 = vunpack.c.l.b16 %v1560
    %v1605 = vunpack.c.l.b16 %v1561
    %v1606 = vunpack.c.l.b16 %v1562
    %v1607 = vunpack.c.l.b16 %v1563
    %v1608 = vunpack.c.l.b16 %v1564
    %v1609 = vunpack.c.l.b16 %v1565
    %v1610 = vunpack.c.l.b16 %v1566
    %v1611 = vunpack.c.l.b16 %v1567
    %v1612 = vunpack.c.l.b16 %v1568
    %v1613 = vunpack.c.l.b16 %v1569
    %v1614 = vunpack.c.l.b16 %v1570
    %v1615 = vunpack.c.l.b16 %v1571
    %v1616 = vpack.c.b16 %v1601, %v1600
    %v1617 = vpack.c.b16 %v1603, %v1602
    %v1618 = vpack.c.b16 %v1605, %v1604
    %v1619 = vpack.c.b16 %v1607, %v1606
    %v1620 = vpack.c.b16 %v1609, %v1608
    %v1621 = vpack.c.b16 %v1611, %v1610
    %v1622 = vpack.c.b16 %v1613, %v1612
    %v1623 = vpack.c.b16 %v1615, %v1614
    %1632 = vmatprep.subr.bf16.mxu0 0
    %1633 = vmatpush1.bf16.msra.mxu0 %v1623
    %1634 = vmatprep.subr.bf16.mxu0 0
    %1635 = vmatpush1.bf16.msra.mxu0 %v1622
    %1636 = vmatprep.subr.bf16.mxu0 0
    %1637 = vmatpush1.bf16.msra.mxu0 %v1621
    %1638 = vmatprep.subr.bf16.mxu0 0
    %1639 = vmatpush1.bf16.msra.mxu0 %v1620
    %1640 = vmatprep.subr.bf16.mxu0 0
    %1641 = vmatpush1.bf16.msra.mxu0 %v1619
    %1642 = vmatprep.subr.bf16.mxu0 0
    %1643 = vmatpush1.bf16.msra.mxu0 %v1618
    %1644 = vmatprep.subr.bf16.mxu0 0
    %1645 = vmatpush1.bf16.msra.mxu0 %v1617
    %1646 = vmatprep.subr.bf16.mxu0 0
    %1647 = vmatpush1.bf16.msra.mxu0 %v1616
    %1648 = vmatprep.subr.bf16.mxu0 0
    %1649 = vmatpush2.bf16.msra.mxu0 0
    %1650 = vmatprep.subr.bf16.mxu0 0
    %1651 = vmatpush2.bf16.msra.mxu0 0
    %1652 = vmatprep.subr.bf16.mxu0 0
    %1653 = vmatpush2.bf16.msra.mxu0 0
    %1654 = vmatprep.subr.bf16.mxu0 0
    %1655 = vmatpush2.bf16.msra.mxu0 0
    %1656 = vmatprep.subr.bf16.mxu0 0
    %1657 = vmatpush2.bf16.msra.mxu0 0
    %1658 = vmatprep.subr.bf16.mxu0 0
    %1659 = vmatpush2.bf16.msra.mxu0 0
    %1660 = vmatprep.subr.bf16.mxu0 0
    %1661 = vmatpush2.bf16.msra.mxu0 0
    %1662 = vmatprep.subr.bf16.mxu0 0
    %1663 = vmatpush2.bf16.msra.mxu0 0
    %1664 = vmatprep.mubr.bf16.mxu0 0
    %1665 = vmatmul.mubr.bf16.gmra.mxu0 %v1572
    %v1666 = vpop.f32.mrf.mxu0
    %v1667 = vadd.f32 %v1583, %v1666
    %v1668 = vpop.f32.mrf.mxu0
    %v1669 = vpop.f32.mrf.mxu0
    %v1670 = vadd.f32 %v1583, %v1669
    %v1671 = vpop.f32.mrf.mxu0
    %1672 = vmatprep.mubr.bf16.mxu0 0
    %1673 = vmatmul.mubr.bf16.gmra.mxu0 %v1573
    %v1674 = vpop.f32.mrf.mxu0
    %v1675 = vadd.f32 %v1583, %v1674
    %v1676 = vpop.f32.mrf.mxu0
    %v1677 = vpop.f32.mrf.mxu0
    %v1678 = vadd.f32 %v1583, %v1677
    %v1679 = vpop.f32.mrf.mxu0
    %1680 = vmatprep.mubr.bf16.mxu0 0
    %1681 = vmatmul.mubr.bf16.gmra.mxu0 %v1574
    %v1682 = vpop.f32.mrf.mxu0
    %v1683 = vadd.f32 %v1583, %v1682
    %v1684 = vpop.f32.mrf.mxu0
    %v1685 = vpop.f32.mrf.mxu0
    %v1686 = vadd.f32 %v1583, %v1685
    %v1687 = vpop.f32.mrf.mxu0
    %1688 = vmatprep.mubr.bf16.mxu0 0
    %1689 = vmatmul.mubr.bf16.gmra.mxu0 %v1575
    %v1690 = vpop.f32.mrf.mxu0
    %v1691 = vadd.f32 %v1583, %v1690
    %v1692 = vpop.f32.mrf.mxu0
    %v1693 = vpop.f32.mrf.mxu0
    %v1694 = vadd.f32 %v1583, %v1693
    %v1695 = vpop.f32.mrf.mxu0
    %1696 = vmatprep.mubr.bf16.mxu0 0
    %1697 = vmatmul.mubr.bf16.gmra.mxu0 %v1576
    %v1698 = vpop.f32.mrf.mxu0
    %v1699 = vadd.f32 %v1583, %v1698
    %v1700 = vpop.f32.mrf.mxu0
    %v1701 = vpop.f32.mrf.mxu0
    %v1702 = vadd.f32 %v1583, %v1701
    %v1703 = vpop.f32.mrf.mxu0
    %1704 = vmatprep.mubr.bf16.mxu0 0
    %1705 = vmatmul.mubr.bf16.gmra.mxu0 %v1577
    %v1706 = vpop.f32.mrf.mxu0
    %v1707 = vadd.f32 %v1583, %v1706
    %v1708 = vpop.f32.mrf.mxu0
    %v1709 = vpop.f32.mrf.mxu0
    %v1710 = vadd.f32 %v1583, %v1709
    %v1711 = vpop.f32.mrf.mxu0
    %1712 = vmatprep.mubr.bf16.mxu0 0
    %1713 = vmatmul.mubr.bf16.gmra.mxu0 %v1578
    %v1714 = vpop.f32.mrf.mxu0
    %v1715 = vadd.f32 %v1583, %v1714
    %v1716 = vpop.f32.mrf.mxu0
    %v1717 = vpop.f32.mrf.mxu0
    %v1718 = vadd.f32 %v1583, %v1717
    %v1719 = vpop.f32.mrf.mxu0
    %1720 = vmatprep.mubr.bf16.mxu0 0
    %1721 = vmatmul.mubr.bf16.gmra.mxu0 %v1579
    %v1722 = vpop.f32.mrf.mxu0
    %v1723 = vadd.f32 %v1583, %v1722
    %v1724 = vpop.f32.mrf.mxu0
    %v1725 = vpop.f32.mrf.mxu0
    %v1726 = vadd.f32 %v1583, %v1725
    %v1727 = vpop.f32.mrf.mxu0
    %1728 = vdwg.mxu0
    %v1729 = vmul.f32 %v1667, %v1667
    %v1730 = vmul.f32 %v1670, %v1670
    %v1731 = vmul.f32 %v1675, %v1675
    %v1732 = vmul.f32 %v1678, %v1678
    %v1733 = vmul.f32 %v1683, %v1683
    %v1734 = vmul.f32 %v1686, %v1686
    %v1735 = vmul.f32 %v1691, %v1691
    %v1736 = vmul.f32 %v1694, %v1694
    %v1737 = vmul.f32 %v1699, %v1699
    %v1738 = vmul.f32 %v1702, %v1702
    %v1739 = vmul.f32 %v1707, %v1707
    %v1740 = vmul.f32 %v1710, %v1710
    %v1741 = vmul.f32 %v1715, %v1715
    %v1742 = vmul.f32 %v1718, %v1718
    %v1743 = vmul.f32 %v1723, %v1723
    %v1744 = vmul.f32 %v1726, %v1726
    %v1745 = vmul.f32 %v1729, 0.035677407
    %v1746 = vmul.f32 %v1730, 0.035677407
    %v1747 = vmul.f32 %v1731, 0.035677407
    %v1748 = vmul.f32 %v1732, 0.035677407
    %v1749 = vmul.f32 %v1733, 0.035677407
    %v1750 = vmul.f32 %v1734, 0.035677407
    %v1751 = vmul.f32 %v1735, 0.035677407
    %v1752 = vmul.f32 %v1736, 0.035677407
    %v1753 = vmul.f32 %v1737, 0.035677407
    %v1754 = vmul.f32 %v1738, 0.035677407
    %v1755 = vmul.f32 %v1739, 0.035677407
    %v1756 = vmul.f32 %v1740, 0.035677407
    %v1757 = vmul.f32 %v1741, 0.035677407
    %v1758 = vmul.f32 %v1742, 0.035677407
    %v1759 = vmul.f32 %v1743, 0.035677407
    %v1760 = vmul.f32 %v1744, 0.035677407
    %v1761 = vadd.f32 %v1745, 0.7978846
    %v1762 = vadd.f32 %v1746, 0.7978846
    %v1763 = vadd.f32 %v1747, 0.7978846
    %v1764 = vadd.f32 %v1748, 0.7978846
    %v1765 = vadd.f32 %v1749, 0.7978846
    %v1766 = vadd.f32 %v1750, 0.7978846
    %v1767 = vadd.f32 %v1751, 0.7978846
    %v1768 = vadd.f32 %v1752, 0.7978846
    %v1769 = vadd.f32 %v1753, 0.7978846
    %v1770 = vadd.f32 %v1754, 0.7978846
    %v1771 = vadd.f32 %v1755, 0.7978846
    %v1772 = vadd.f32 %v1756, 0.7978846
    %v1773 = vadd.f32 %v1757, 0.7978846
    %v1774 = vadd.f32 %v1758, 0.7978846
    %v1775 = vadd.f32 %v1759, 0.7978846
    %v1776 = vadd.f32 %v1760, 0.7978846
    %v1777 = vmul.f32 %v1667, %v1761
    %v1778 = vmul.f32 %v1670, %v1762
    %v1779 = vmul.f32 %v1675, %v1763
    %v1780 = vmul.f32 %v1678, %v1764
    %v1781 = vmul.f32 %v1683, %v1765
    %v1782 = vmul.f32 %v1686, %v1766
    %v1783 = vmul.f32 %v1691, %v1767
    %v1784 = vmul.f32 %v1694, %v1768
    %v1785 = vmul.f32 %v1699, %v1769
    %v1786 = vmul.f32 %v1702, %v1770
    %v1787 = vmul.f32 %v1707, %v1771
    %v1788 = vmul.f32 %v1710, %v1772
    %v1789 = vmul.f32 %v1715, %v1773
    %v1790 = vmul.f32 %v1718, %v1774
    %v1791 = vmul.f32 %v1723, %v1775
    %v1792 = vmul.f32 %v1726, %v1776
    %v1793 = vtanh.pop %v1777
    %v1794 = vtanh.pop %v1778
    %v1795 = vtanh.pop %v1779
    %v1796 = vtanh.pop %v1780
    %v1797 = vtanh.pop %v1781
    %v1798 = vtanh.pop %v1782
    %v1799 = vtanh.pop %v1783
    %v1800 = vtanh.pop %v1784
    %v1801 = vtanh.pop %v1785
    %v1802 = vtanh.pop %v1786
    %v1803 = vtanh.pop %v1787
    %v1804 = vtanh.pop %v1788
    %v1805 = vtanh.pop %v1789
    %v1806 = vtanh.pop %v1790
    %v1807 = vtanh.pop %v1791
    %v1808 = vtanh.pop %v1792
    %v1809 = vmul.f32 %v1793, 0.5
    %v1810 = vmul.f32 %v1794, 0.5
    %v1811 = vmul.f32 %v1795, 0.5
    %v1812 = vmul.f32 %v1796, 0.5
    %v1813 = vmul.f32 %v1797, 0.5
    %v1814 = vmul.f32 %v1798, 0.5
    %v1815 = vmul.f32 %v1799, 0.5
    %v1816 = vmul.f32 %v1800, 0.5
    %v1817 = vmul.f32 %v1801, 0.5
    %v1818 = vmul.f32 %v1802, 0.5
    %v1819 = vmul.f32 %v1803, 0.5
    %v1820 = vmul.f32 %v1804, 0.5
    %v1821 = vmul.f32 %v1805, 0.5
    %v1822 = vmul.f32 %v1806, 0.5
    %v1823 = vmul.f32 %v1807, 0.5
    %v1824 = vmul.f32 %v1808, 0.5
    %v1825 = vadd.f32 %v1809, 0.5
    %v1826 = vadd.f32 %v1810, 0.5
    %v1827 = vadd.f32 %v1811, 0.5
    %v1828 = vadd.f32 %v1812, 0.5
    %v1829 = vadd.f32 %v1813, 0.5
    %v1830 = vadd.f32 %v1814, 0.5
    %v1831 = vadd.f32 %v1815, 0.5
    %v1832 = vadd.f32 %v1816, 0.5
    %v1833 = vadd.f32 %v1817, 0.5
    %v1834 = vadd.f32 %v1818, 0.5
    %v1835 = vadd.f32 %v1819, 0.5
    %v1836 = vadd.f32 %v1820, 0.5
    %v1837 = vadd.f32 %v1821, 0.5
    %v1838 = vadd.f32 %v1822, 0.5
    %v1839 = vadd.f32 %v1823, 0.5
    %v1840 = vadd.f32 %v1824, 0.5
    %v1841 = vmul.f32 %v1667, %v1825
    %v1842 = vmul.f32 %v1670, %v1826
    %v1843 = vmul.f32 %v1675, %v1827
    %v1844 = vmul.f32 %v1678, %v1828
    %v1845 = vmul.f32 %v1683, %v1829
    %v1846 = vmul.f32 %v1686, %v1830
    %v1847 = vmul.f32 %v1691, %v1831
    %v1848 = vmul.f32 %v1694, %v1832
    %v1849 = vmul.f32 %v1699, %v1833
    %v1850 = vmul.f32 %v1702, %v1834
    %v1851 = vmul.f32 %v1707, %v1835
    %v1852 = vmul.f32 %v1710, %v1836
    %v1853 = vmul.f32 %v1715, %v1837
    %v1854 = vmul.f32 %v1718, %v1838
    %v1855 = vmul.f32 %v1723, %v1839
    %v1856 = vmul.f32 %v1726, %v1840
    %s1857 = scalar_lea.vmem [#allocation2], 384
    %v1858 = vld [vmem:[%s1857] sm:$0xf]
    %v1859 = vld [vmem:[%s1857 + $0x4] sm:$0xf]
    %v1860 = vld [vmem:[%s1857 + $0x8] sm:$0xf]
    %v1861 = vld [vmem:[%s1857 + $0xc] sm:$0xf]
    %v1862 = vld [vmem:[%s1857 + $0x10] sm:$0xf]
    %v1863 = vld [vmem:[%s1857 + $0x14] sm:$0xf]
    %v1864 = vld [vmem:[%s1857 + $0x18] sm:$0xf]
    %v1865 = vld [vmem:[%s1857 + $0x1c] sm:$0xf]
    %v1866 = vld [vmem:[%s1857 + $0x20] sm:$0xf]
    %v1867 = vld [vmem:[%s1857 + $0x24] sm:$0xf]
    %v1868 = vld [vmem:[%s1857 + $0x28] sm:$0xf]
    %v1869 = vld [vmem:[%s1857 + $0x2c] sm:$0xf]
    %v1870 = vld [vmem:[%s1857 + $0x30] sm:$0xf]
    %v1871 = vld [vmem:[%s1857 + $0x34] sm:$0xf]
    %v1872 = vld [vmem:[%s1857 + $0x38] sm:$0xf]
    %v1873 = vld [vmem:[%s1857 + $0x3c] sm:$0xf]
    %v1874 = vpack.c.bf16 %v1842, %v1841
    %v1875 = vpack.c.bf16 %v1844, %v1843
    %v1876 = vpack.c.bf16 %v1846, %v1845
    %v1877 = vpack.c.bf16 %v1848, %v1847
    %v1878 = vpack.c.bf16 %v1850, %v1849
    %v1879 = vpack.c.bf16 %v1852, %v1851
    %v1880 = vpack.c.bf16 %v1854, %v1853
    %v1881 = vpack.c.bf16 %v1856, %v1855
    %v1882 = vlaneseq
    %v1883 = vshrl.u32 %v1882, 7
    %v1884 = vsub.s32 6, %v1883
    %v1885 = vrot.slane %v45, %v1884
    %v1902 = vunpack.c.l.b16 %v1858
    %v1903 = vunpack.c.l.b16 %v1859
    %v1904 = vunpack.c.l.b16 %v1860
    %v1905 = vunpack.c.l.b16 %v1861
    %v1906 = vunpack.c.l.b16 %v1862
    %v1907 = vunpack.c.l.b16 %v1863
    %v1908 = vunpack.c.l.b16 %v1864
    %v1909 = vunpack.c.l.b16 %v1865
    %v1910 = vunpack.c.l.b16 %v1866
    %v1911 = vunpack.c.l.b16 %v1867
    %v1912 = vunpack.c.l.b16 %v1868
    %v1913 = vunpack.c.l.b16 %v1869
    %v1914 = vunpack.c.l.b16 %v1870
    %v1915 = vunpack.c.l.b16 %v1871
    %v1916 = vunpack.c.l.b16 %v1872
    %v1917 = vunpack.c.l.b16 %v1873
    %v1918 = vpack.c.b16 %v1903, %v1902
    %v1919 = vpack.c.b16 %v1905, %v1904
    %v1920 = vpack.c.b16 %v1907, %v1906
    %v1921 = vpack.c.b16 %v1909, %v1908
    %v1922 = vpack.c.b16 %v1911, %v1910
    %v1923 = vpack.c.b16 %v1913, %v1912
    %v1924 = vpack.c.b16 %v1915, %v1914
    %v1925 = vpack.c.b16 %v1917, %v1916
    %1934 = vmatprep.subr.bf16.mxu0 0
    %1935 = vmatpush1.bf16.msra.mxu0 %v1925
    %1936 = vmatprep.subr.bf16.mxu0 0
    %1937 = vmatpush1.bf16.msra.mxu0 %v1924
    %1938 = vmatprep.subr.bf16.mxu0 0
    %1939 = vmatpush1.bf16.msra.mxu0 %v1923
    %1940 = vmatprep.subr.bf16.mxu0 0
    %1941 = vmatpush1.bf16.msra.mxu0 %v1922
    %1942 = vmatprep.subr.bf16.mxu0 0
    %1943 = vmatpush1.bf16.msra.mxu0 %v1921
    %1944 = vmatprep.subr.bf16.mxu0 0
    %1945 = vmatpush1.bf16.msra.mxu0 %v1920
    %1946 = vmatprep.subr.bf16.mxu0 0
    %1947 = vmatpush1.bf16.msra.mxu0 %v1919
    %1948 = vmatprep.subr.bf16.mxu0 0
    %1949 = vmatpush1.bf16.msra.mxu0 %v1918
    %1950 = vmatprep.subr.bf16.mxu0 0
    %1951 = vmatpush2.bf16.msra.mxu0 0
    %1952 = vmatprep.subr.bf16.mxu0 0
    %1953 = vmatpush2.bf16.msra.mxu0 0
    %1954 = vmatprep.subr.bf16.mxu0 0
    %1955 = vmatpush2.bf16.msra.mxu0 0
    %1956 = vmatprep.subr.bf16.mxu0 0
    %1957 = vmatpush2.bf16.msra.mxu0 0
    %1958 = vmatprep.subr.bf16.mxu0 0
    %1959 = vmatpush2.bf16.msra.mxu0 0
    %1960 = vmatprep.subr.bf16.mxu0 0
    %1961 = vmatpush2.bf16.msra.mxu0 0
    %1962 = vmatprep.subr.bf16.mxu0 0
    %1963 = vmatpush2.bf16.msra.mxu0 0
    %1964 = vmatprep.subr.bf16.mxu0 0
    %1965 = vmatpush2.bf16.msra.mxu0 0
    %1966 = vmatprep.mubr.bf16.mxu0 0
    %1967 = vmatmul.mubr.bf16.gmra.mxu0 %v1874
    %v1968 = vpop.f32.mrf.mxu0
    %v1969 = vadd.f32 %v1885, %v1968
    %v1970 = vpop.f32.mrf.mxu0
    %v1971 = vpop.f32.mrf.mxu0
    %v1972 = vadd.f32 %v1885, %v1971
    %v1973 = vpop.f32.mrf.mxu0
    %1974 = vmatprep.mubr.bf16.mxu0 0
    %1975 = vmatmul.mubr.bf16.gmra.mxu0 %v1875
    %v1976 = vpop.f32.mrf.mxu0
    %v1977 = vadd.f32 %v1885, %v1976
    %v1978 = vpop.f32.mrf.mxu0
    %v1979 = vpop.f32.mrf.mxu0
    %v1980 = vadd.f32 %v1885, %v1979
    %v1981 = vpop.f32.mrf.mxu0
    %1982 = vmatprep.mubr.bf16.mxu0 0
    %1983 = vmatmul.mubr.bf16.gmra.mxu0 %v1876
    %v1984 = vpop.f32.mrf.mxu0
    %v1985 = vadd.f32 %v1885, %v1984
    %v1986 = vpop.f32.mrf.mxu0
    %v1987 = vpop.f32.mrf.mxu0
    %v1988 = vadd.f32 %v1885, %v1987
    %v1989 = vpop.f32.mrf.mxu0
    %1990 = vmatprep.mubr.bf16.mxu0 0
    %1991 = vmatmul.mubr.bf16.gmra.mxu0 %v1877
    %v1992 = vpop.f32.mrf.mxu0
    %v1993 = vadd.f32 %v1885, %v1992
    %v1994 = vpop.f32.mrf.mxu0
    %v1995 = vpop.f32.mrf.mxu0
    %v1996 = vadd.f32 %v1885, %v1995
    %v1997 = vpop.f32.mrf.mxu0
    %1998 = vmatprep.mubr.bf16.mxu0 0
    %1999 = vmatmul.mubr.bf16.gmra.mxu0 %v1878
    %v2000 = vpop.f32.mrf.mxu0
    %v2001 = vadd.f32 %v1885, %v2000
    %v2002 = vpop.f32.mrf.mxu0
    %v2003 = vpop.f32.mrf.mxu0
    %v2004 = vadd.f32 %v1885, %v2003
    %v2005 = vpop.f32.mrf.mxu0
    %2006 = vmatprep.mubr.bf16.mxu0 0
    %2007 = vmatmul.mubr.bf16.gmra.mxu0 %v1879
    %v2008 = vpop.f32.mrf.mxu0
    %v2009 = vadd.f32 %v1885, %v2008
    %v2010 = vpop.f32.mrf.mxu0
    %v2011 = vpop.f32.mrf.mxu0
    %v2012 = vadd.f32 %v1885, %v2011
    %v2013 = vpop.f32.mrf.mxu0
    %2014 = vmatprep.mubr.bf16.mxu0 0
    %2015 = vmatmul.mubr.bf16.gmra.mxu0 %v1880
    %v2016 = vpop.f32.mrf.mxu0
    %v2017 = vadd.f32 %v1885, %v2016
    %v2018 = vpop.f32.mrf.mxu0
    %v2019 = vpop.f32.mrf.mxu0
    %v2020 = vadd.f32 %v1885, %v2019
    %v2021 = vpop.f32.mrf.mxu0
    %2022 = vmatprep.mubr.bf16.mxu0 0
    %2023 = vmatmul.mubr.bf16.gmra.mxu0 %v1881
    %v2024 = vpop.f32.mrf.mxu0
    %v2025 = vadd.f32 %v1885, %v2024
    %v2026 = vpop.f32.mrf.mxu0
    %v2027 = vpop.f32.mrf.mxu0
    %v2028 = vadd.f32 %v1885, %v2027
    %v2029 = vpop.f32.mrf.mxu0
    %2030 = vdwg.mxu0
    %v2031 = vmul.f32 %v1969, %v1969
    %v2032 = vmul.f32 %v1972, %v1972
    %v2033 = vmul.f32 %v1977, %v1977
    %v2034 = vmul.f32 %v1980, %v1980
    %v2035 = vmul.f32 %v1985, %v1985
    %v2036 = vmul.f32 %v1988, %v1988
    %v2037 = vmul.f32 %v1993, %v1993
    %v2038 = vmul.f32 %v1996, %v1996
    %v2039 = vmul.f32 %v2001, %v2001
    %v2040 = vmul.f32 %v2004, %v2004
    %v2041 = vmul.f32 %v2009, %v2009
    %v2042 = vmul.f32 %v2012, %v2012
    %v2043 = vmul.f32 %v2017, %v2017
    %v2044 = vmul.f32 %v2020, %v2020
    %v2045 = vmul.f32 %v2025, %v2025
    %v2046 = vmul.f32 %v2028, %v2028
    %v2047 = vmul.f32 %v2031, 0.035677407
    %v2048 = vmul.f32 %v2032, 0.035677407
    %v2049 = vmul.f32 %v2033, 0.035677407
    %v2050 = vmul.f32 %v2034, 0.035677407
    %v2051 = vmul.f32 %v2035, 0.035677407
    %v2052 = vmul.f32 %v2036, 0.035677407
    %v2053 = vmul.f32 %v2037, 0.035677407
    %v2054 = vmul.f32 %v2038, 0.035677407
    %v2055 = vmul.f32 %v2039, 0.035677407
    %v2056 = vmul.f32 %v2040, 0.035677407
    %v2057 = vmul.f32 %v2041, 0.035677407
    %v2058 = vmul.f32 %v2042, 0.035677407
    %v2059 = vmul.f32 %v2043, 0.035677407
    %v2060 = vmul.f32 %v2044, 0.035677407
    %v2061 = vmul.f32 %v2045, 0.035677407
    %v2062 = vmul.f32 %v2046, 0.035677407
    %v2063 = vadd.f32 %v2047, 0.7978846
    %v2064 = vadd.f32 %v2048, 0.7978846
    %v2065 = vadd.f32 %v2049, 0.7978846
    %v2066 = vadd.f32 %v2050, 0.7978846
    %v2067 = vadd.f32 %v2051, 0.7978846
    %v2068 = vadd.f32 %v2052, 0.7978846
    %v2069 = vadd.f32 %v2053, 0.7978846
    %v2070 = vadd.f32 %v2054, 0.7978846
    %v2071 = vadd.f32 %v2055, 0.7978846
    %v2072 = vadd.f32 %v2056, 0.7978846
    %v2073 = vadd.f32 %v2057, 0.7978846
    %v2074 = vadd.f32 %v2058, 0.7978846
    %v2075 = vadd.f32 %v2059, 0.7978846
    %v2076 = vadd.f32 %v2060, 0.7978846
    %v2077 = vadd.f32 %v2061, 0.7978846
    %v2078 = vadd.f32 %v2062, 0.7978846
    %v2079 = vmul.f32 %v1969, %v2063
    %v2080 = vmul.f32 %v1972, %v2064
    %v2081 = vmul.f32 %v1977, %v2065
    %v2082 = vmul.f32 %v1980, %v2066
    %v2083 = vmul.f32 %v1985, %v2067
    %v2084 = vmul.f32 %v1988, %v2068
    %v2085 = vmul.f32 %v1993, %v2069
    %v2086 = vmul.f32 %v1996, %v2070
    %v2087 = vmul.f32 %v2001, %v2071
    %v2088 = vmul.f32 %v2004, %v2072
    %v2089 = vmul.f32 %v2009, %v2073
    %v2090 = vmul.f32 %v2012, %v2074
    %v2091 = vmul.f32 %v2017, %v2075
    %v2092 = vmul.f32 %v2020, %v2076
    %v2093 = vmul.f32 %v2025, %v2077
    %v2094 = vmul.f32 %v2028, %v2078
    %v2095 = vtanh.pop %v2079
    %v2096 = vtanh.pop %v2080
    %v2097 = vtanh.pop %v2081
    %v2098 = vtanh.pop %v2082
    %v2099 = vtanh.pop %v2083
    %v2100 = vtanh.pop %v2084
    %v2101 = vtanh.pop %v2085
    %v2102 = vtanh.pop %v2086
    %v2103 = vtanh.pop %v2087
    %v2104 = vtanh.pop %v2088
    %v2105 = vtanh.pop %v2089
    %v2106 = vtanh.pop %v2090
    %v2107 = vtanh.pop %v2091
    %v2108 = vtanh.pop %v2092
    %v2109 = vtanh.pop %v2093
    %v2110 = vtanh.pop %v2094
    %v2111 = vmul.f32 %v2095, 0.5
    %v2112 = vmul.f32 %v2096, 0.5
    %v2113 = vmul.f32 %v2097, 0.5
    %v2114 = vmul.f32 %v2098, 0.5
    %v2115 = vmul.f32 %v2099, 0.5
    %v2116 = vmul.f32 %v2100, 0.5
    %v2117 = vmul.f32 %v2101, 0.5
    %v2118 = vmul.f32 %v2102, 0.5
    %v2119 = vmul.f32 %v2103, 0.5
    %v2120 = vmul.f32 %v2104, 0.5
    %v2121 = vmul.f32 %v2105, 0.5
    %v2122 = vmul.f32 %v2106, 0.5
    %v2123 = vmul.f32 %v2107, 0.5
    %v2124 = vmul.f32 %v2108, 0.5
    %v2125 = vmul.f32 %v2109, 0.5
    %v2126 = vmul.f32 %v2110, 0.5
    %v2127 = vadd.f32 %v2111, 0.5
    %v2128 = vadd.f32 %v2112, 0.5
    %v2129 = vadd.f32 %v2113, 0.5
    %v2130 = vadd.f32 %v2114, 0.5
    %v2131 = vadd.f32 %v2115, 0.5
    %v2132 = vadd.f32 %v2116, 0.5
    %v2133 = vadd.f32 %v2117, 0.5
    %v2134 = vadd.f32 %v2118, 0.5
    %v2135 = vadd.f32 %v2119, 0.5
    %v2136 = vadd.f32 %v2120, 0.5
    %v2137 = vadd.f32 %v2121, 0.5
    %v2138 = vadd.f32 %v2122, 0.5
    %v2139 = vadd.f32 %v2123, 0.5
    %v2140 = vadd.f32 %v2124, 0.5
    %v2141 = vadd.f32 %v2125, 0.5
    %v2142 = vadd.f32 %v2126, 0.5
    %v2143 = vmul.f32 %v1969, %v2127
    %v2144 = vmul.f32 %v1972, %v2128
    %v2145 = vmul.f32 %v1977, %v2129
    %v2146 = vmul.f32 %v1980, %v2130
    %v2147 = vmul.f32 %v1985, %v2131
    %v2148 = vmul.f32 %v1988, %v2132
    %v2149 = vmul.f32 %v1993, %v2133
    %v2150 = vmul.f32 %v1996, %v2134
    %v2151 = vmul.f32 %v2001, %v2135
    %v2152 = vmul.f32 %v2004, %v2136
    %v2153 = vmul.f32 %v2009, %v2137
    %v2154 = vmul.f32 %v2012, %v2138
    %v2155 = vmul.f32 %v2017, %v2139
    %v2156 = vmul.f32 %v2020, %v2140
    %v2157 = vmul.f32 %v2025, %v2141
    %v2158 = vmul.f32 %v2028, %v2142
    %2159 = vst [vmem:[%s3] sm:$0xff] %v2143
    %2160 = vst [vmem:[%s3 + $0x8] sm:$0xff] %v2144
    %2161 = vst [vmem:[%s3 + $0x10] sm:$0xff] %v2145
    %2162 = vst [vmem:[%s3 + $0x18] sm:$0xff] %v2146
    %2163 = vst [vmem:[%s3 + $0x20] sm:$0xff] %v2147
    %2164 = vst [vmem:[%s3 + $0x28] sm:$0xff] %v2148
    %2165 = vst [vmem:[%s3 + $0x30] sm:$0xff] %v2149
    %2166 = vst [vmem:[%s3 + $0x38] sm:$0xff] %v2150
    %2167 = vst [vmem:[%s3 + $0x40] sm:$0xff] %v2151
    %2168 = vst [vmem:[%s3 + $0x48] sm:$0xff] %v2152
    %2169 = vst [vmem:[%s3 + $0x50] sm:$0xff] %v2153
    %2170 = vst [vmem:[%s3 + $0x58] sm:$0xff] %v2154
    %2171 = vst [vmem:[%s3 + $0x60] sm:$0xff] %v2155
    %2172 = vst [vmem:[%s3 + $0x68] sm:$0xff] %v2156
    %2173 = vst [vmem:[%s3 + $0x70] sm:$0xff] %v2157
    %2174 = vst [vmem:[%s3 + $0x78] sm:$0xff] %v2158
    // Predicated region
    $region18: #{model_forward.1} parent=1 // pred_check
      _
    $region19: #{model_forward.1} parent=1 // pred_check_branch
      %2176 = sbr.rel (0) target = $region21
    $region20: #{model_forward.1} parent=1 // pred_region
      _
    $region21: #{model_forward.1} parent=1 // pred_fallthru
      _
    // Predicated region
    $region22: #{model_forward.1} parent=1 // pred_check
      _
    $region23: #{model_forward.1} parent=1 // pred_check_branch
      %2178 = sbr.rel (0) target = $region25
    $region24: #{model_forward.1} parent=1 // pred_region
      _
    $region25: #{model_forward.1} parent=1 // pred_fallthru
      _
    %2179 = vsyncpa [#allocation3], 1

</llo_original>
